<compile_context>
chip_gen: v5e
topology: v5e:2x2
jax: 0.10.0
libtpu: 0.0.40
codegen_flags: <defaults>
</compile_context>

<pallas_src>
import functools

import jax
import jax.numpy as jnp
from jax import lax
from jax.experimental import pallas as pl
from jax.experimental.pallas import tpu as pltpu


# Rows per grid step. 1024 x ob_dim f32 double-buffered is well under the scoped
# VMEM limit on v5e/v6e/v7x; large enough to amortize per-step overhead.
TILE_N = 1024


def _round_up(x: int, m: int) -> int:
    return ((x + m - 1) // m) * m


def _make_rnd_kernel(n_layers: int):
    """Fused (f, f_hat) MLP + row-wise L2 norm of (f_hat - f) for one batch tile."""

    def kernel(x_ref, *refs):
        params = refs[:-1]          # w0, b0, w1, b1, ..., w_last, b_last (fused)
        out_ref = refs[-1]          # (1, TILE_N) lane-dense norms

        # bf16 operands for the MXU, f32 accumulation.
        h = x_ref[...].astype(jnp.bfloat16)
        for l in range(n_layers):
            w = params[2 * l][...]                        # bf16 (in, out)
            b = params[2 * l + 1][...]                    # f32  (1, out)
            h = jnp.tanh(jnp.dot(h, w, preferred_element_type=jnp.float32) + b)
            h = h.astype(jnp.bfloat16)

        w = params[2 * n_layers][...]
        b = params[2 * n_layers + 1][...]
        # Fused last layer directly produces diff = f_hat(x) - f(x).
        diff = jnp.dot(h, w, preferred_element_type=jnp.float32) + b  # (TILE_N, out)

        sq = diff * diff                                   # f32, keep precision
        ones_row = jnp.ones((1, sq.shape[1]), jnp.float32)
        # (1, out) contracted with (TILE_N, out) over the out axis -> (1, TILE_N):
        # reduces over out_dim AND lays the per-row sums along lanes so the store
        # is a full-width (lane-dense) vst instead of a width-1 masked store.
        nsq_row = lax.dot_general(
            ones_row, sq, (((1,), (1,)), ((), ())),
            preferred_element_type=jnp.float32)
        out_ref[...] = jnp.sqrt(nsq_row)

    return kernel


def pack_fused_params(f_params, fhat_params, n_layers, w_dtype=jnp.bfloat16):
    """Host-side fusion of f and f_hat into one widened MLP (see header)."""
    if n_layers == 0:
        wf, bf = f_params
        wh, bh = fhat_params
        return [(wh - wf).astype(w_dtype), (bh - bf).astype(jnp.float32)]

    packed = []
    # Layer 0: concat along output features.
    wf0, bf0 = f_params[0], f_params[1]
    wh0, bh0 = fhat_params[0], fhat_params[1]
    packed.append(jnp.concatenate([wf0, wh0], axis=1).astype(w_dtype))
    packed.append(jnp.concatenate([bf0, bh0], axis=1).astype(jnp.float32))
    # Hidden layers: block-diagonal so the two halves stay independent.
    for l in range(1, n_layers):
        wf, bf = f_params[2 * l], f_params[2 * l + 1]
        wh, bh = fhat_params[2 * l], fhat_params[2 * l + 1]
        size = wf.shape[0]
        z = jnp.zeros((size, size), wf.dtype)
        w = jnp.concatenate(
            [jnp.concatenate([wf, z], axis=1),
             jnp.concatenate([z, wh], axis=1)], axis=0)
        packed.append(w.astype(w_dtype))
        packed.append(jnp.concatenate([bf, bh], axis=1).astype(jnp.float32))
    # Last layer: output = f_hat(x) - f(x).
    wf, bf = f_params[2 * n_layers], f_params[2 * n_layers + 1]
    wh, bh = fhat_params[2 * n_layers], fhat_params[2 * n_layers + 1]
    packed.append(jnp.concatenate([-wf, wh], axis=0).astype(w_dtype))
    packed.append((bh - bf).astype(jnp.float32))
    return packed


def rnd_forward(ob_no, packed_params, n_layers: int, tile_n: int = TILE_N):
    """ob_no: (N, ob_dim) float32. Returns (N,) prediction errors."""
    N, ob_dim = ob_no.shape
    out_dim = int(packed_params[-1].shape[1])

    # Pad the batch to a multiple of tile_n so every block is full-size
    # (padding rows are zeros; their outputs are sliced off below).
    n_pad = _round_up(max(N, 1), tile_n)
    if n_pad != N:
        ob_no = jnp.pad(ob_no, ((0, n_pad - N), (0, 0)))
    num_tiles = n_pad // tile_n

    kernel = _make_rnd_kernel(n_layers)

    # ob_no is tiled over the batch; weights/biases are small and stay resident
    # in VMEM (constant index_map -> DMA'd once, reused across grid steps).
    in_specs = [pl.BlockSpec((tile_n, ob_dim), lambda i: (i, 0))]
    in_specs += [pl.BlockSpec(tuple(p.shape), lambda i: (0, 0)) for p in packed_params]
    out_spec = pl.BlockSpec((1, tile_n), lambda i: (0, i))

    # Advisory cost estimate so XLA schedules this sensibly inside larger jits.
    weight_flops = 2 * sum(int(p.shape[0]) * int(p.shape[1])
                           for p in packed_params[0::2])
    hidden_width = sum(int(packed_params[2 * l + 1].shape[1]) for l in range(n_layers))
    cost = pl.CostEstimate(
        flops=int(n_pad * (weight_flops + 3 * out_dim)),
        transcendentals=int(n_pad * hidden_width),
        bytes_accessed=int(n_pad * ob_dim * 4 + n_pad * 4
                           + sum(int(p.size) * p.dtype.itemsize
                                 for p in packed_params)),
    )

    out = pl.pallas_call(
        kernel,
        out_shape=jax.ShapeDtypeStruct((1, n_pad), jnp.float32),
        grid=(num_tiles,),
        in_specs=in_specs,
        out_specs=out_spec,
        compiler_params=pltpu.CompilerParams(
            dimension_semantics=("parallel",)),
        cost_estimate=cost,
    )(ob_no, *packed_params)
    return out[0, :N]


def build_mlp_params(key, in_dim, out_dim, n_layers, size, init_method):
    """Deterministic parameter init mimicking init_method_1 (uniform) / _2 (normal)."""
    dims = [in_dim] + [size] * n_layers + [out_dim]
    params = []
    for i in range(n_layers + 1):
        key, kw, kb = jax.random.split(key, 3)
        if init_method == "uniform":
            w = jax.random.uniform(kw, (dims[i], dims[i + 1]), jnp.float32)
            b = jax.random.uniform(kb, (1, dims[i + 1]), jnp.float32)
        else:  # "normal"
            w = jax.random.normal(kw, (dims[i], dims[i + 1]), jnp.float32)
            b = jax.random.normal(kb, (1, dims[i + 1]), jnp.float32)
        params.append(w)
        params.append(b)
    return params


def reference_forward(ob_no, f_params, fhat_params, n_layers):
    """Pure-JAX reference mirroring the kernel's bf16 matmul-operand rounding."""
    def q(a):  # round-trip through bf16, compute in f32
        return a.astype(jnp.bfloat16).astype(jnp.float32)

    def mlp(params, x):
        h = q(x)
        for l in range(n_layers):
            h = q(jnp.tanh(h @ q(params[2 * l]) + params[2 * l + 1]))
        return h @ q(params[2 * n_layers]) + params[2 * n_layers + 1]

    diff = mlp(fhat_params, ob_no) - mlp(f_params, ob_no)
    return jnp.sqrt(jnp.sum(diff * diff, axis=1))


if __name__ == "__main__":
    # Small, forward-consistent hparams.
    batch = 8
    ob_dim = 16
    rnd_output_size = 8
    rnd_n_layers = 2
    rnd_size = 32
    # predict_TD = False  (default RND branch)
    # TODO(synk): predict_TD=True branch (one-hot action scatter + concat + TD
    # target against next_ob_no) not implemented.

    root = jax.random.PRNGKey(0)
    k_x, k_f, k_fh = jax.random.split(root, 3)

    ob_no = jax.random.normal(k_x, (batch, ob_dim), jnp.float32)

    f_params = build_mlp_params(
        k_f, ob_dim, rnd_output_size, rnd_n_layers, rnd_size, "uniform")   # init_method_1
    fhat_params = build_mlp_params(
        k_fh, ob_dim, rnd_output_size, rnd_n_layers, rnd_size, "normal")   # init_method_2

    packed = pack_fused_params(f_params, fhat_params, rnd_n_layers)

    fwd = jax.jit(functools.partial(rnd_forward, n_layers=rnd_n_layers))
    err = fwd(ob_no, packed)
    jax.block_until_ready(err)

    ref = reference_forward(ob_no, f_params, fhat_params, rnd_n_layers)
    assert err.shape == (batch,), err.shape
    # Sanity tolerance: bf16 matmul operands + implementation-level tanh/rounding
    # differences; real bugs (sign/layer/reduction) would be O(1) errors.
    assert jnp.allclose(err, ref, atol=5e-3, rtol=5e-3), (err, ref)

    print("KERNEL_OK")
</pallas_src>

<mosaic_0001>
module attributes {stable_mosaic.version = 11 : i64} {
  func.func @kernel(%arg0: i32, %arg1: memref<1024x16xf32, #tpu.memory_space<vmem>>, %arg2: memref<16x64xbf16, #tpu.memory_space<vmem>>, %arg3: memref<1x64xf32, #tpu.memory_space<vmem>>, %arg4: memref<64x64xbf16, #tpu.memory_space<vmem>>, %arg5: memref<1x64xf32, #tpu.memory_space<vmem>>, %arg6: memref<64x8xbf16, #tpu.memory_space<vmem>>, %arg7: memref<1x8xf32, #tpu.memory_space<vmem>>, %arg8: memref<1x1024xf32, #tpu.memory_space<vmem>>) attributes {dimension_semantics = [#tpu.dimension_semantics<parallel>], iteration_bounds = array<i64: 1>, scalar_prefetch = 0 : i64, scratch_operands = 0 : i64, tpu.core_type = #tpu.core_type<tc>, window_params = [{transform_indices = @transform_0, window_bounds = array<i64: 1024, 16>}, {pipeline_mode = #tpu.pipeline_mode<synchronous>, transform_indices = @transform_1, window_bounds = array<i64: 16, 64>}, {pipeline_mode = #tpu.pipeline_mode<synchronous>, transform_indices = @transform_2, window_bounds = array<i64: 1, 64>}, {pipeline_mode = #tpu.pipeline_mode<synchronous>, transform_indices = @transform_3, window_bounds = array<i64: 64, 64>}, {pipeline_mode = #tpu.pipeline_mode<synchronous>, transform_indices = @transform_4, window_bounds = array<i64: 1, 64>}, {pipeline_mode = #tpu.pipeline_mode<synchronous>, transform_indices = @transform_5, window_bounds = array<i64: 64, 8>}, {pipeline_mode = #tpu.pipeline_mode<synchronous>, transform_indices = @transform_6, window_bounds = array<i64: 1, 8>}, {transform_indices = @transform_7, window_bounds = array<i64: 1, 1024>}]} {
    %c0 = arith.constant 0 : index
    %c0_0 = arith.constant 0 : index
    %0 = vector.load %arg1[%c0, %c0_0] : memref<1024x16xf32, #tpu.memory_space<vmem>>, vector<1024x16xf32>
    %1 = arith.truncf %0 : vector<1024x16xf32> to vector<1024x16xbf16>
    %c0_1 = arith.constant 0 : index
    %c0_2 = arith.constant 0 : index
    %2 = vector.load %arg2[%c0_1, %c0_2] : memref<16x64xbf16, #tpu.memory_space<vmem>>, vector<16x64xbf16>
    %c0_3 = arith.constant 0 : index
    %c0_4 = arith.constant 0 : index
    %3 = vector.load %arg3[%c0_3, %c0_4] : memref<1x64xf32, #tpu.memory_space<vmem>>, vector<1x64xf32>
    %cst = arith.constant dense<0.000000e+00> : vector<1024x64xf32>
    %4 = tpu.matmul %1, %2, %cst {dimension_numbers = #tpu.dot_dimension_numbers<[1], [0], [0], [1], [0, 0, 1, 1], [], []>} : vector<1024x16xbf16>, vector<16x64xbf16>, vector<1024x64xf32> -> vector<1024x64xf32>
    %5 = vector.broadcast %3 : vector<1x64xf32> to vector<1024x64xf32>
    %6 = arith.addf %4, %5 : vector<1024x64xf32>
    %7 = math.tanh %6 : vector<1024x64xf32>
    %8 = arith.truncf %7 : vector<1024x64xf32> to vector<1024x64xbf16>
    %c0_5 = arith.constant 0 : index
    %c0_6 = arith.constant 0 : index
    %9 = vector.load %arg4[%c0_5, %c0_6] : memref<64x64xbf16, #tpu.memory_space<vmem>>, vector<64x64xbf16>
    %c0_7 = arith.constant 0 : index
    %c0_8 = arith.constant 0 : index
    %10 = vector.load %arg5[%c0_7, %c0_8] : memref<1x64xf32, #tpu.memory_space<vmem>>, vector<1x64xf32>
    %cst_9 = arith.constant dense<0.000000e+00> : vector<1024x64xf32>
    %11 = tpu.matmul %8, %9, %cst_9 {dimension_numbers = #tpu.dot_dimension_numbers<[1], [0], [0], [1], [0, 0, 1, 1], [], []>} : vector<1024x64xbf16>, vector<64x64xbf16>, vector<1024x64xf32> -> vector<1024x64xf32>
    %12 = vector.broadcast %10 : vector<1x64xf32> to vector<1024x64xf32>
    %13 = arith.addf %11, %12 : vector<1024x64xf32>
    %14 = math.tanh %13 : vector<1024x64xf32>
    %15 = arith.truncf %14 : vector<1024x64xf32> to vector<1024x64xbf16>
    %c0_10 = arith.constant 0 : index
    %c0_11 = arith.constant 0 : index
    %16 = vector.load %arg6[%c0_10, %c0_11] : memref<64x8xbf16, #tpu.memory_space<vmem>>, vector<64x8xbf16>
    %c0_12 = arith.constant 0 : index
    %c0_13 = arith.constant 0 : index
    %17 = vector.load %arg7[%c0_12, %c0_13] : memref<1x8xf32, #tpu.memory_space<vmem>>, vector<1x8xf32>
    %cst_14 = arith.constant dense<0.000000e+00> : vector<1024x8xf32>
    %18 = tpu.matmul %15, %16, %cst_14 {dimension_numbers = #tpu.dot_dimension_numbers<[1], [0], [0], [1], [0, 0, 1, 1], [], []>} : vector<1024x64xbf16>, vector<64x8xbf16>, vector<1024x8xf32> -> vector<1024x8xf32>
    %19 = vector.broadcast %17 : vector<1x8xf32> to vector<1024x8xf32>
    %20 = arith.addf %18, %19 : vector<1024x8xf32>
    %21 = arith.mulf %20, %20 : vector<1024x8xf32>
    %cst_15 = arith.constant 1.000000e+00 : f32
    %22 = vector.broadcast %cst_15 : f32 to vector<1x8xf32>
    %cst_16 = arith.constant dense<0.000000e+00> : vector<1x1024xf32>
    %23 = tpu.matmul %22, %21, %cst_16 {dimension_numbers = #tpu.dot_dimension_numbers<[1], [1], [0], [0], [0, 0, 1, 0], [], []>} : vector<1x8xf32>, vector<1024x8xf32>, vector<1x1024xf32> -> vector<1x1024xf32>
    %24 = math.sqrt %23 : vector<1x1024xf32>
    %c0_17 = arith.constant 0 : index
    %c0_18 = arith.constant 0 : index
    %25 = vector.load %arg8[%c0_17, %c0_18] : memref<1x1024xf32, #tpu.memory_space<vmem>>, vector<1x1024xf32>
    tpu.vector_store %arg8[%c0_17, %c0_18], %24 {strides = array<i32>} : memref<1x1024xf32, #tpu.memory_space<vmem>>, vector<1x1024xf32>,
    return
  }
  func.func @transform_0(%arg0: i32) -> (i32, i32) {
    %c0_i32 = arith.constant 0 : i32
    %c0_i32_0 = arith.constant 0 : i32
    return %arg0, %c0_i32 : i32, i32
  }
  func.func @transform_1(%arg0: i32) -> (i32, i32) {
    %c0_i32 = arith.constant 0 : i32
    %c0_i32_0 = arith.constant 0 : i32
    %c0_i32_1 = arith.constant 0 : i32
    return %c0_i32, %c0_i32_0 : i32, i32
  }
  func.func @transform_2(%arg0: i32) -> (i32, i32) {
    %c0_i32 = arith.constant 0 : i32
    %c0_i32_0 = arith.constant 0 : i32
    %c0_i32_1 = arith.constant 0 : i32
    return %c0_i32, %c0_i32_0 : i32, i32
  }
  func.func @transform_3(%arg0: i32) -> (i32, i32) {
    %c0_i32 = arith.constant 0 : i32
    %c0_i32_0 = arith.constant 0 : i32
    %c0_i32_1 = arith.constant 0 : i32
    return %c0_i32, %c0_i32_0 : i32, i32
  }
  func.func @transform_4(%arg0: i32) -> (i32, i32) {
    %c0_i32 = arith.constant 0 : i32
    %c0_i32_0 = arith.constant 0 : i32
    %c0_i32_1 = arith.constant 0 : i32
    return %c0_i32, %c0_i32_0 : i32, i32
  }
  func.func @transform_5(%arg0: i32) -> (i32, i32) {
    %c0_i32 = arith.constant 0 : i32
    %c0_i32_0 = arith.constant 0 : i32
    %c0_i32_1 = arith.constant 0 : i32
    return %c0_i32, %c0_i32_0 : i32, i32
  }
  func.func @transform_6(%arg0: i32) -> (i32, i32) {
    %c0_i32 = arith.constant 0 : i32
    %c0_i32_0 = arith.constant 0 : i32
    %c0_i32_1 = arith.constant 0 : i32
    return %c0_i32, %c0_i32_0 : i32, i32
  }
  func.func @transform_7(%arg0: i32) -> (i32, i32) {
    %c0_i32 = arith.constant 0 : i32
    %c0_i32_0 = arith.constant 0 : i32
    return %c0_i32, %arg0 : i32, i32
  }
}

</mosaic_0001>

<llo_original>
// kernel: rnd_forward.1
$region0: #{rnd_forward.1}
  #allocation0 [shape = 'u32[]', space=smem, size = 0x4, offset = 0x4, fixed_abs, tag = 'smem constant byte address 0x4 - core index']
  #allocation1 [shape = 'u32[72,128]{1,0:T(1,128)}', space=vmem, size = 0x9000, scoped, tag = 'internal scratch']
  %s0 = inlined_call_operand.vmem [shape: f32[1024,16], index: 0, kind: input, shape index: {}]
  %s1 = inlined_call_operand.vmem [shape: bf16[16,64], index: 1, kind: input, shape index: {}]
  %s2 = inlined_call_operand.vmem [shape: f32[1,64], index: 2, kind: input, shape index: {}]
  %s3 = inlined_call_operand.vmem [shape: bf16[64,64], index: 3, kind: input, shape index: {}]
  %s4 = inlined_call_operand.vmem [shape: f32[1,64], index: 4, kind: input, shape index: {}]
  %s5 = inlined_call_operand.vmem [shape: bf16[64,8], index: 5, kind: input, shape index: {}]
  %s6 = inlined_call_operand.vmem [shape: f32[1,8], index: 6, kind: input, shape index: {}]
  %s7 = inlined_call_operand.vmem [shape: f32[1,1024], index: 7, kind: output, shape index: {}]
  %s8 = sld [smem:[#allocation0]]
  $region38: #{rnd_forward.1} parent=0
    _
  %s10 = ssub.s32 1, %s8
  %s11 = scalar_select 0, %s10, %s8
  // Predicated region
  $region2: #{rnd_forward.1} parent=0 // pred_check
    _
  $region3: #{rnd_forward.1} parent=0 // pred_check_branch
    %13 = sbr.rel (0) target = $region5
  $region4: #{rnd_forward.1} parent=0 // pred_region
    _
  $region5: #{rnd_forward.1} parent=0 // pred_fallthru
    _
  // Predicated region
  $region6: #{rnd_forward.1} parent=0 // pred_check
    _
  $region7: #{rnd_forward.1} parent=0 // pred_check_branch
    %15 = sbr.rel (0) target = $region9
  $region8: #{rnd_forward.1} parent=0 // pred_region
    _
  $region9: #{rnd_forward.1} parent=0 // pred_fallthru
    _
  // Predicated region
  $region10: #{rnd_forward.1} parent=0 // pred_check
    _
  $region11: #{rnd_forward.1} parent=0 // pred_check_branch
    %17 = sbr.rel (0) target = $region13
  $region12: #{rnd_forward.1} parent=0 // pred_region
    _
  $region13: #{rnd_forward.1} parent=0 // pred_fallthru
    _
  // Predicated region
  $region14: #{rnd_forward.1} parent=0 // pred_check
    _
  $region15: #{rnd_forward.1} parent=0 // pred_check_branch
    %19 = sbr.rel (0) target = $region17
  $region16: #{rnd_forward.1} parent=0 // pred_region
    _
  $region17: #{rnd_forward.1} parent=0 // pred_fallthru
    _
  // Predicated region
  $region18: #{rnd_forward.1} parent=0 // pred_check
    _
  $region19: #{rnd_forward.1} parent=0 // pred_check_branch
    %21 = sbr.rel (0) target = $region21
  $region20: #{rnd_forward.1} parent=0 // pred_region
    _
  $region21: #{rnd_forward.1} parent=0 // pred_fallthru
    _
  // Predicated region
  $region22: #{rnd_forward.1} parent=0 // pred_check
    _
  $region23: #{rnd_forward.1} parent=0 // pred_check_branch
    %23 = sbr.rel (0) target = $region25
  $region24: #{rnd_forward.1} parent=0 // pred_region
    _
  $region25: #{rnd_forward.1} parent=0 // pred_fallthru
    _
  // Predicated region
  $region26: #{rnd_forward.1} parent=0 // pred_check
    _
  $region27: #{rnd_forward.1} parent=0 // pred_check_branch
    %25 = sbr.rel (0) target = $region29
  $region28: #{rnd_forward.1} parent=0 // pred_region
    _
  $region29: #{rnd_forward.1} parent=0 // pred_fallthru
    _
  %v27 = vld [vmem:[%s0] sm:$0xff]
  %v28 = vld [vmem:[%s0 + $0x8] sm:$0xff]
  %v29 = vld [vmem:[%s0 + $0x10] sm:$0xff]
  %v30 = vld [vmem:[%s0 + $0x18] sm:$0xff]
  %v31 = vld [vmem:[%s0 + $0x20] sm:$0xff]
  %v32 = vld [vmem:[%s0 + $0x28] sm:$0xff]
  %v33 = vld [vmem:[%s0 + $0x30] sm:$0xff]
  %v34 = vld [vmem:[%s0 + $0x38] sm:$0xff]
  %v35 = vld [vmem:[%s0 + $0x40] sm:$0xff]
  %v36 = vld [vmem:[%s0 + $0x48] sm:$0xff]
  %v37 = vld [vmem:[%s0 + $0x50] sm:$0xff]
  %v38 = vld [vmem:[%s0 + $0x58] sm:$0xff]
  %v39 = vld [vmem:[%s0 + $0x60] sm:$0xff]
  %v40 = vld [vmem:[%s0 + $0x68] sm:$0xff]
  %v41 = vld [vmem:[%s0 + $0x70] sm:$0xff]
  %v42 = vld [vmem:[%s0 + $0x78] sm:$0xff]
  %v43 = vld [vmem:[%s0 + $0x80] sm:$0xff]
  %v44 = vld [vmem:[%s0 + $0x88] sm:$0xff]
  %v45 = vld [vmem:[%s0 + $0x90] sm:$0xff]
  %v46 = vld [vmem:[%s0 + $0x98] sm:$0xff]
  %v47 = vld [vmem:[%s0 + $0xa0] sm:$0xff]
  %v48 = vld [vmem:[%s0 + $0xa8] sm:$0xff]
  %v49 = vld [vmem:[%s0 + $0xb0] sm:$0xff]
  %v50 = vld [vmem:[%s0 + $0xb8] sm:$0xff]
  %v51 = vld [vmem:[%s0 + $0xc0] sm:$0xff]
  %v52 = vld [vmem:[%s0 + $0xc8] sm:$0xff]
  %v53 = vld [vmem:[%s0 + $0xd0] sm:$0xff]
  %v54 = vld [vmem:[%s0 + $0xd8] sm:$0xff]
  %v55 = vld [vmem:[%s0 + $0xe0] sm:$0xff]
  %v56 = vld [vmem:[%s0 + $0xe8] sm:$0xff]
  %v57 = vld [vmem:[%s0 + $0xf0] sm:$0xff]
  %v58 = vld [vmem:[%s0 + $0xf8] sm:$0xff]
  %v59 = vld [vmem:[%s0 + $0x100] sm:$0xff]
  %v60 = vld [vmem:[%s0 + $0x108] sm:$0xff]
  %v61 = vld [vmem:[%s0 + $0x110] sm:$0xff]
  %v62 = vld [vmem:[%s0 + $0x118] sm:$0xff]
  %v63 = vld [vmem:[%s0 + $0x120] sm:$0xff]
  %v64 = vld [vmem:[%s0 + $0x128] sm:$0xff]
  %v65 = vld [vmem:[%s0 + $0x130] sm:$0xff]
  %v66 = vld [vmem:[%s0 + $0x138] sm:$0xff]
  %v67 = vld [vmem:[%s0 + $0x140] sm:$0xff]
  %v68 = vld [vmem:[%s0 + $0x148] sm:$0xff]
  %v69 = vld [vmem:[%s0 + $0x150] sm:$0xff]
  %v70 = vld [vmem:[%s0 + $0x158] sm:$0xff]
  %v71 = vld [vmem:[%s0 + $0x160] sm:$0xff]
  %v72 = vld [vmem:[%s0 + $0x168] sm:$0xff]
  %v73 = vld [vmem:[%s0 + $0x170] sm:$0xff]
  %v74 = vld [vmem:[%s0 + $0x178] sm:$0xff]
  %v75 = vld [vmem:[%s0 + $0x180] sm:$0xff]
  %v76 = vld [vmem:[%s0 + $0x188] sm:$0xff]
  %v77 = vld [vmem:[%s0 + $0x190] sm:$0xff]
  %v78 = vld [vmem:[%s0 + $0x198] sm:$0xff]
  %v79 = vld [vmem:[%s0 + $0x1a0] sm:$0xff]
  %v80 = vld [vmem:[%s0 + $0x1a8] sm:$0xff]
  %v81 = vld [vmem:[%s0 + $0x1b0] sm:$0xff]
  %v82 = vld [vmem:[%s0 + $0x1b8] sm:$0xff]
  %v83 = vld [vmem:[%s0 + $0x1c0] sm:$0xff]
  %v84 = vld [vmem:[%s0 + $0x1c8] sm:$0xff]
  %v85 = vld [vmem:[%s0 + $0x1d0] sm:$0xff]
  %v86 = vld [vmem:[%s0 + $0x1d8] sm:$0xff]
  %v87 = vld [vmem:[%s0 + $0x1e0] sm:$0xff]
  %v88 = vld [vmem:[%s0 + $0x1e8] sm:$0xff]
  %v89 = vld [vmem:[%s0 + $0x1f0] sm:$0xff]
  %v90 = vld [vmem:[%s0 + $0x1f8] sm:$0xff]
  %v91 = vld [vmem:[%s0 + $0x200] sm:$0xff]
  %v92 = vld [vmem:[%s0 + $0x208] sm:$0xff]
  %v93 = vld [vmem:[%s0 + $0x210] sm:$0xff]
  %v94 = vld [vmem:[%s0 + $0x218] sm:$0xff]
  %v95 = vld [vmem:[%s0 + $0x220] sm:$0xff]
  %v96 = vld [vmem:[%s0 + $0x228] sm:$0xff]
  %v97 = vld [vmem:[%s0 + $0x230] sm:$0xff]
  %v98 = vld [vmem:[%s0 + $0x238] sm:$0xff]
  %v99 = vld [vmem:[%s0 + $0x240] sm:$0xff]
  %v100 = vld [vmem:[%s0 + $0x248] sm:$0xff]
  %v101 = vld [vmem:[%s0 + $0x250] sm:$0xff]
  %v102 = vld [vmem:[%s0 + $0x258] sm:$0xff]
  %v103 = vld [vmem:[%s0 + $0x260] sm:$0xff]
  %v104 = vld [vmem:[%s0 + $0x268] sm:$0xff]
  %v105 = vld [vmem:[%s0 + $0x270] sm:$0xff]
  %v106 = vld [vmem:[%s0 + $0x278] sm:$0xff]
  %v107 = vld [vmem:[%s0 + $0x280] sm:$0xff]
  %v108 = vld [vmem:[%s0 + $0x288] sm:$0xff]
  %v109 = vld [vmem:[%s0 + $0x290] sm:$0xff]
  %v110 = vld [vmem:[%s0 + $0x298] sm:$0xff]
  %v111 = vld [vmem:[%s0 + $0x2a0] sm:$0xff]
  %v112 = vld [vmem:[%s0 + $0x2a8] sm:$0xff]
  %v113 = vld [vmem:[%s0 + $0x2b0] sm:$0xff]
  %v114 = vld [vmem:[%s0 + $0x2b8] sm:$0xff]
  %v115 = vld [vmem:[%s0 + $0x2c0] sm:$0xff]
  %v116 = vld [vmem:[%s0 + $0x2c8] sm:$0xff]
  %v117 = vld [vmem:[%s0 + $0x2d0] sm:$0xff]
  %v118 = vld [vmem:[%s0 + $0x2d8] sm:$0xff]
  %v119 = vld [vmem:[%s0 + $0x2e0] sm:$0xff]
  %v120 = vld [vmem:[%s0 + $0x2e8] sm:$0xff]
  %v121 = vld [vmem:[%s0 + $0x2f0] sm:$0xff]
  %v122 = vld [vmem:[%s0 + $0x2f8] sm:$0xff]
  %v123 = vld [vmem:[%s0 + $0x300] sm:$0xff]
  %v124 = vld [vmem:[%s0 + $0x308] sm:$0xff]
  %v125 = vld [vmem:[%s0 + $0x310] sm:$0xff]
  %v126 = vld [vmem:[%s0 + $0x318] sm:$0xff]
  %v127 = vld [vmem:[%s0 + $0x320] sm:$0xff]
  %v128 = vld [vmem:[%s0 + $0x328] sm:$0xff]
  %v129 = vld [vmem:[%s0 + $0x330] sm:$0xff]
  %v130 = vld [vmem:[%s0 + $0x338] sm:$0xff]
  %v131 = vld [vmem:[%s0 + $0x340] sm:$0xff]
  %v132 = vld [vmem:[%s0 + $0x348] sm:$0xff]
  %v133 = vld [vmem:[%s0 + $0x350] sm:$0xff]
  %v134 = vld [vmem:[%s0 + $0x358] sm:$0xff]
  %v135 = vld [vmem:[%s0 + $0x360] sm:$0xff]
  %v136 = vld [vmem:[%s0 + $0x368] sm:$0xff]
  %v137 = vld [vmem:[%s0 + $0x370] sm:$0xff]
  %v138 = vld [vmem:[%s0 + $0x378] sm:$0xff]
  %v139 = vld [vmem:[%s0 + $0x380] sm:$0xff]
  %v140 = vld [vmem:[%s0 + $0x388] sm:$0xff]
  %v141 = vld [vmem:[%s0 + $0x390] sm:$0xff]
  %v142 = vld [vmem:[%s0 + $0x398] sm:$0xff]
  %v143 = vld [vmem:[%s0 + $0x3a0] sm:$0xff]
  %v144 = vld [vmem:[%s0 + $0x3a8] sm:$0xff]
  %v145 = vld [vmem:[%s0 + $0x3b0] sm:$0xff]
  %v146 = vld [vmem:[%s0 + $0x3b8] sm:$0xff]
  %v147 = vld [vmem:[%s0 + $0x3c0] sm:$0xff]
  %v148 = vld [vmem:[%s0 + $0x3c8] sm:$0xff]
  %v149 = vld [vmem:[%s0 + $0x3d0] sm:$0xff]
  %v150 = vld [vmem:[%s0 + $0x3d8] sm:$0xff]
  %v151 = vld [vmem:[%s0 + $0x3e0] sm:$0xff]
  %v152 = vld [vmem:[%s0 + $0x3e8] sm:$0xff]
  %v153 = vld [vmem:[%s0 + $0x3f0] sm:$0xff]
  %v154 = vld [vmem:[%s0 + $0x3f8] sm:$0xff]
  %v155 = vpack.c.bf16 %v28, %v27
  %v156 = vpack.c.bf16 %v30, %v29
  %v157 = vpack.c.bf16 %v32, %v31
  %v158 = vpack.c.bf16 %v34, %v33
  %v159 = vpack.c.bf16 %v36, %v35
  %v160 = vpack.c.bf16 %v38, %v37
  %v161 = vpack.c.bf16 %v40, %v39
  %v162 = vpack.c.bf16 %v42, %v41
  %v163 = vpack.c.bf16 %v44, %v43
  %v164 = vpack.c.bf16 %v46, %v45
  %v165 = vpack.c.bf16 %v48, %v47
  %v166 = vpack.c.bf16 %v50, %v49
  %v167 = vpack.c.bf16 %v52, %v51
  %v168 = vpack.c.bf16 %v54, %v53
  %v169 = vpack.c.bf16 %v56, %v55
  %v170 = vpack.c.bf16 %v58, %v57
  %v171 = vpack.c.bf16 %v60, %v59
  %v172 = vpack.c.bf16 %v62, %v61
  %v173 = vpack.c.bf16 %v64, %v63
  %v174 = vpack.c.bf16 %v66, %v65
  %v175 = vpack.c.bf16 %v68, %v67
  %v176 = vpack.c.bf16 %v70, %v69
  %v177 = vpack.c.bf16 %v72, %v71
  %v178 = vpack.c.bf16 %v74, %v73
  %v179 = vpack.c.bf16 %v76, %v75
  %v180 = vpack.c.bf16 %v78, %v77
  %v181 = vpack.c.bf16 %v80, %v79
  %v182 = vpack.c.bf16 %v82, %v81
  %v183 = vpack.c.bf16 %v84, %v83
  %v184 = vpack.c.bf16 %v86, %v85
  %v185 = vpack.c.bf16 %v88, %v87
  %v186 = vpack.c.bf16 %v90, %v89
  %v187 = vpack.c.bf16 %v92, %v91
  %v188 = vpack.c.bf16 %v94, %v93
  %v189 = vpack.c.bf16 %v96, %v95
  %v190 = vpack.c.bf16 %v98, %v97
  %v191 = vpack.c.bf16 %v100, %v99
  %v192 = vpack.c.bf16 %v102, %v101
  %v193 = vpack.c.bf16 %v104, %v103
  %v194 = vpack.c.bf16 %v106, %v105
  %v195 = vpack.c.bf16 %v108, %v107
  %v196 = vpack.c.bf16 %v110, %v109
  %v197 = vpack.c.bf16 %v112, %v111
  %v198 = vpack.c.bf16 %v114, %v113
  %v199 = vpack.c.bf16 %v116, %v115
  %v200 = vpack.c.bf16 %v118, %v117
  %v201 = vpack.c.bf16 %v120, %v119
  %v202 = vpack.c.bf16 %v122, %v121
  %v203 = vpack.c.bf16 %v124, %v123
  %v204 = vpack.c.bf16 %v126, %v125
  %v205 = vpack.c.bf16 %v128, %v127
  %v206 = vpack.c.bf16 %v130, %v129
  %v207 = vpack.c.bf16 %v132, %v131
  %v208 = vpack.c.bf16 %v134, %v133
  %v209 = vpack.c.bf16 %v136, %v135
  %v210 = vpack.c.bf16 %v138, %v137
  %v211 = vpack.c.bf16 %v140, %v139
  %v212 = vpack.c.bf16 %v142, %v141
  %v213 = vpack.c.bf16 %v144, %v143
  %v214 = vpack.c.bf16 %v146, %v145
  %v215 = vpack.c.bf16 %v148, %v147
  %v216 = vpack.c.bf16 %v150, %v149
  %v217 = vpack.c.bf16 %v152, %v151
  %v218 = vpack.c.bf16 %v154, %v153
  %v219 = vld [vmem:[%s1] sm:$0xf]
  %v220 = vld [vmem:[%s1 + $0x4] sm:$0xf]
  %v221 = vld [vmem:[%s2] sm:$0x1]
  %v223 = vperm.slane %v221, 0
  %v227 = vunpack.c.l.b16 %v219
  %v228 = vunpack.c.l.b16 %v220
  %v229 = vpack.c.b16 %v228, %v227
  %vm231 = vcmask 130048
  %v233 = vsel %vm231, %v155, 0
  %v236 = vsel %vm231, %v156, 0
  %v239 = vsel %vm231, %v157, 0
  %v242 = vsel %vm231, %v158, 0
  %v245 = vsel %vm231, %v159, 0
  %v248 = vsel %vm231, %v160, 0
  %v251 = vsel %vm231, %v161, 0
  %v254 = vsel %vm231, %v162, 0
  %v257 = vsel %vm231, %v163, 0
  %v260 = vsel %vm231, %v164, 0
  %v263 = vsel %vm231, %v165, 0
  %v266 = vsel %vm231, %v166, 0
  %v269 = vsel %vm231, %v167, 0
  %v272 = vsel %vm231, %v168, 0
  %v275 = vsel %vm231, %v169, 0
  %v278 = vsel %vm231, %v170, 0
  %v281 = vsel %vm231, %v171, 0
  %v284 = vsel %vm231, %v172, 0
  %v287 = vsel %vm231, %v173, 0
  %v290 = vsel %vm231, %v174, 0
  %v293 = vsel %vm231, %v175, 0
  %v296 = vsel %vm231, %v176, 0
  %v299 = vsel %vm231, %v177, 0
  %v302 = vsel %vm231, %v178, 0
  %v305 = vsel %vm231, %v179, 0
  %v308 = vsel %vm231, %v180, 0
  %v311 = vsel %vm231, %v181, 0
  %v314 = vsel %vm231, %v182, 0
  %v317 = vsel %vm231, %v183, 0
  %v320 = vsel %vm231, %v184, 0
  %v323 = vsel %vm231, %v185, 0
  %v326 = vsel %vm231, %v186, 0
  %v329 = vsel %vm231, %v187, 0
  %v332 = vsel %vm231, %v188, 0
  %v335 = vsel %vm231, %v189, 0
  %v338 = vsel %vm231, %v190, 0
  %v341 = vsel %vm231, %v191, 0
  %v344 = vsel %vm231, %v192, 0
  %v347 = vsel %vm231, %v193, 0
  %v350 = vsel %vm231, %v194, 0
  %v353 = vsel %vm231, %v195, 0
  %v356 = vsel %vm231, %v196, 0
  %v359 = vsel %vm231, %v197, 0
  %v362 = vsel %vm231, %v198, 0
  %v365 = vsel %vm231, %v199, 0
  %v368 = vsel %vm231, %v200, 0
  %v371 = vsel %vm231, %v201, 0
  %v374 = vsel %vm231, %v202, 0
  %v377 = vsel %vm231, %v203, 0
  %v380 = vsel %vm231, %v204, 0
  %v383 = vsel %vm231, %v205, 0
  %v386 = vsel %vm231, %v206, 0
  %v389 = vsel %vm231, %v207, 0
  %v392 = vsel %vm231, %v208, 0
  %v395 = vsel %vm231, %v209, 0
  %v398 = vsel %vm231, %v210, 0
  %v401 = vsel %vm231, %v211, 0
  %v404 = vsel %vm231, %v212, 0
  %v407 = vsel %vm231, %v213, 0
  %v410 = vsel %vm231, %v214, 0
  %v413 = vsel %vm231, %v215, 0
  %v416 = vsel %vm231, %v216, 0
  %v419 = vsel %vm231, %v217, 0
  %v422 = vsel %vm231, %v218, 0
  %424 = vmatpush.bf16.msra.mxu0 0
  %425 = vmatpush.bf16.msra.mxu0 0
  %426 = vmatpush.bf16.msra.mxu0 0
  %427 = vmatpush.bf16.msra.mxu0 0
  %428 = vmatpush.bf16.msra.mxu0 0
  %429 = vmatpush.bf16.msra.mxu0 0
  %430 = vmatpush.bf16.msra.mxu0 0
  %431 = vmatpush.bf16.msra.mxu0 %v229
  %432 = vmatmul.bf16.gmra.mxu0 %v233
  %v433 = vpop.f32.mrf.mxu0
  %v434 = vadd.f32 %v223, %v433
  %v435 = vpop.f32.mrf.mxu0
  %v436 = vadd.f32 %v223, %v435
  %437 = vmatmul.bf16.gmra.mxu0 %v236
  %v438 = vpop.f32.mrf.mxu0
  %v439 = vadd.f32 %v223, %v438
  %v440 = vpop.f32.mrf.mxu0
  %v441 = vadd.f32 %v223, %v440
  %442 = vmatmul.bf16.gmra.mxu0 %v239
  %v443 = vpop.f32.mrf.mxu0
  %v444 = vadd.f32 %v223, %v443
  %v445 = vpop.f32.mrf.mxu0
  %v446 = vadd.f32 %v223, %v445
  %447 = vmatmul.bf16.gmra.mxu0 %v242
  %v448 = vpop.f32.mrf.mxu0
  %v449 = vadd.f32 %v223, %v448
  %v450 = vpop.f32.mrf.mxu0
  %v451 = vadd.f32 %v223, %v450
  %452 = vmatmul.bf16.gmra.mxu0 %v245
  %v453 = vpop.f32.mrf.mxu0
  %v454 = vadd.f32 %v223, %v453
  %v455 = vpop.f32.mrf.mxu0
  %v456 = vadd.f32 %v223, %v455
  %457 = vmatmul.bf16.gmra.mxu0 %v248
  %v458 = vpop.f32.mrf.mxu0
  %v459 = vadd.f32 %v223, %v458
  %v460 = vpop.f32.mrf.mxu0
  %v461 = vadd.f32 %v223, %v460
  %462 = vmatmul.bf16.gmra.mxu0 %v251
  %v463 = vpop.f32.mrf.mxu0
  %v464 = vadd.f32 %v223, %v463
  %v465 = vpop.f32.mrf.mxu0
  %v466 = vadd.f32 %v223, %v465
  %467 = vmatmul.bf16.gmra.mxu0 %v254
  %v468 = vpop.f32.mrf.mxu0
  %v469 = vadd.f32 %v223, %v468
  %v470 = vpop.f32.mrf.mxu0
  %v471 = vadd.f32 %v223, %v470
  %472 = vmatmul.bf16.gmra.mxu0 %v257
  %v473 = vpop.f32.mrf.mxu0
  %v474 = vadd.f32 %v223, %v473
  %v475 = vpop.f32.mrf.mxu0
  %v476 = vadd.f32 %v223, %v475
  %477 = vmatmul.bf16.gmra.mxu0 %v260
  %v478 = vpop.f32.mrf.mxu0
  %v479 = vadd.f32 %v223, %v478
  %v480 = vpop.f32.mrf.mxu0
  %v481 = vadd.f32 %v223, %v480
  %482 = vmatmul.bf16.gmra.mxu0 %v263
  %v483 = vpop.f32.mrf.mxu0
  %v484 = vadd.f32 %v223, %v483
  %v485 = vpop.f32.mrf.mxu0
  %v486 = vadd.f32 %v223, %v485
  %487 = vmatmul.bf16.gmra.mxu0 %v266
  %v488 = vpop.f32.mrf.mxu0
  %v489 = vadd.f32 %v223, %v488
  %v490 = vpop.f32.mrf.mxu0
  %v491 = vadd.f32 %v223, %v490
  %492 = vmatmul.bf16.gmra.mxu0 %v269
  %v493 = vpop.f32.mrf.mxu0
  %v494 = vadd.f32 %v223, %v493
  %v495 = vpop.f32.mrf.mxu0
  %v496 = vadd.f32 %v223, %v495
  %497 = vmatmul.bf16.gmra.mxu0 %v272
  %v498 = vpop.f32.mrf.mxu0
  %v499 = vadd.f32 %v223, %v498
  %v500 = vpop.f32.mrf.mxu0
  %v501 = vadd.f32 %v223, %v500
  %502 = vmatmul.bf16.gmra.mxu0 %v275
  %v503 = vpop.f32.mrf.mxu0
  %v504 = vadd.f32 %v223, %v503
  %v505 = vpop.f32.mrf.mxu0
  %v506 = vadd.f32 %v223, %v505
  %507 = vmatmul.bf16.gmra.mxu0 %v278
  %v508 = vpop.f32.mrf.mxu0
  %v509 = vadd.f32 %v223, %v508
  %v510 = vpop.f32.mrf.mxu0
  %v511 = vadd.f32 %v223, %v510
  %512 = vmatmul.bf16.gmra.mxu0 %v281
  %v513 = vpop.f32.mrf.mxu0
  %v514 = vadd.f32 %v223, %v513
  %v515 = vpop.f32.mrf.mxu0
  %v516 = vadd.f32 %v223, %v515
  %517 = vmatmul.bf16.gmra.mxu0 %v284
  %v518 = vpop.f32.mrf.mxu0
  %v519 = vadd.f32 %v223, %v518
  %v520 = vpop.f32.mrf.mxu0
  %v521 = vadd.f32 %v223, %v520
  %522 = vmatmul.bf16.gmra.mxu0 %v287
  %v523 = vpop.f32.mrf.mxu0
  %v524 = vadd.f32 %v223, %v523
  %v525 = vpop.f32.mrf.mxu0
  %v526 = vadd.f32 %v223, %v525
  %527 = vmatmul.bf16.gmra.mxu0 %v290
  %v528 = vpop.f32.mrf.mxu0
  %v529 = vadd.f32 %v223, %v528
  %v530 = vpop.f32.mrf.mxu0
  %v531 = vadd.f32 %v223, %v530
  %532 = vmatmul.bf16.gmra.mxu0 %v293
  %v533 = vpop.f32.mrf.mxu0
  %v534 = vadd.f32 %v223, %v533
  %v535 = vpop.f32.mrf.mxu0
  %v536 = vadd.f32 %v223, %v535
  %537 = vmatmul.bf16.gmra.mxu0 %v296
  %v538 = vpop.f32.mrf.mxu0
  %v539 = vadd.f32 %v223, %v538
  %v540 = vpop.f32.mrf.mxu0
  %v541 = vadd.f32 %v223, %v540
  %542 = vmatmul.bf16.gmra.mxu0 %v299
  %v543 = vpop.f32.mrf.mxu0
  %v544 = vadd.f32 %v223, %v543
  %v545 = vpop.f32.mrf.mxu0
  %v546 = vadd.f32 %v223, %v545
  %547 = vmatmul.bf16.gmra.mxu0 %v302
  %v548 = vpop.f32.mrf.mxu0
  %v549 = vadd.f32 %v223, %v548
  %v550 = vpop.f32.mrf.mxu0
  %v551 = vadd.f32 %v223, %v550
  %552 = vmatmul.bf16.gmra.mxu0 %v305
  %v553 = vpop.f32.mrf.mxu0
  %v554 = vadd.f32 %v223, %v553
  %v555 = vpop.f32.mrf.mxu0
  %v556 = vadd.f32 %v223, %v555
  %557 = vmatmul.bf16.gmra.mxu0 %v308
  %v558 = vpop.f32.mrf.mxu0
  %v559 = vadd.f32 %v223, %v558
  %v560 = vpop.f32.mrf.mxu0
  %v561 = vadd.f32 %v223, %v560
  %562 = vmatmul.bf16.gmra.mxu0 %v311
  %v563 = vpop.f32.mrf.mxu0
  %v564 = vadd.f32 %v223, %v563
  %v565 = vpop.f32.mrf.mxu0
  %v566 = vadd.f32 %v223, %v565
  %567 = vmatmul.bf16.gmra.mxu0 %v314
  %v568 = vpop.f32.mrf.mxu0
  %v569 = vadd.f32 %v223, %v568
  %v570 = vpop.f32.mrf.mxu0
  %v571 = vadd.f32 %v223, %v570
  %572 = vmatmul.bf16.gmra.mxu0 %v317
  %v573 = vpop.f32.mrf.mxu0
  %v574 = vadd.f32 %v223, %v573
  %v575 = vpop.f32.mrf.mxu0
  %v576 = vadd.f32 %v223, %v575
  %577 = vmatmul.bf16.gmra.mxu0 %v320
  %v578 = vpop.f32.mrf.mxu0
  %v579 = vadd.f32 %v223, %v578
  %v580 = vpop.f32.mrf.mxu0
  %v581 = vadd.f32 %v223, %v580
  %582 = vmatmul.bf16.gmra.mxu0 %v323
  %v583 = vpop.f32.mrf.mxu0
  %v584 = vadd.f32 %v223, %v583
  %v585 = vpop.f32.mrf.mxu0
  %v586 = vadd.f32 %v223, %v585
  %587 = vmatmul.bf16.gmra.mxu0 %v326
  %v588 = vpop.f32.mrf.mxu0
  %v589 = vadd.f32 %v223, %v588
  %v590 = vpop.f32.mrf.mxu0
  %v591 = vadd.f32 %v223, %v590
  %592 = vmatmul.bf16.gmra.mxu0 %v329
  %v593 = vpop.f32.mrf.mxu0
  %v594 = vadd.f32 %v223, %v593
  %v595 = vpop.f32.mrf.mxu0
  %v596 = vadd.f32 %v223, %v595
  %597 = vmatmul.bf16.gmra.mxu0 %v332
  %v598 = vpop.f32.mrf.mxu0
  %v599 = vadd.f32 %v223, %v598
  %v600 = vpop.f32.mrf.mxu0
  %v601 = vadd.f32 %v223, %v600
  %602 = vmatmul.bf16.gmra.mxu0 %v335
  %v603 = vpop.f32.mrf.mxu0
  %v604 = vadd.f32 %v223, %v603
  %v605 = vpop.f32.mrf.mxu0
  %v606 = vadd.f32 %v223, %v605
  %607 = vmatmul.bf16.gmra.mxu0 %v338
  %v608 = vpop.f32.mrf.mxu0
  %v609 = vadd.f32 %v223, %v608
  %v610 = vpop.f32.mrf.mxu0
  %v611 = vadd.f32 %v223, %v610
  %612 = vmatmul.bf16.gmra.mxu0 %v341
  %v613 = vpop.f32.mrf.mxu0
  %v614 = vadd.f32 %v223, %v613
  %v615 = vpop.f32.mrf.mxu0
  %v616 = vadd.f32 %v223, %v615
  %617 = vmatmul.bf16.gmra.mxu0 %v344
  %v618 = vpop.f32.mrf.mxu0
  %v619 = vadd.f32 %v223, %v618
  %v620 = vpop.f32.mrf.mxu0
  %v621 = vadd.f32 %v223, %v620
  %622 = vmatmul.bf16.gmra.mxu0 %v347
  %v623 = vpop.f32.mrf.mxu0
  %v624 = vadd.f32 %v223, %v623
  %v625 = vpop.f32.mrf.mxu0
  %v626 = vadd.f32 %v223, %v625
  %627 = vmatmul.bf16.gmra.mxu0 %v350
  %v628 = vpop.f32.mrf.mxu0
  %v629 = vadd.f32 %v223, %v628
  %v630 = vpop.f32.mrf.mxu0
  %v631 = vadd.f32 %v223, %v630
  %632 = vmatmul.bf16.gmra.mxu0 %v353
  %v633 = vpop.f32.mrf.mxu0
  %v634 = vadd.f32 %v223, %v633
  %v635 = vpop.f32.mrf.mxu0
  %v636 = vadd.f32 %v223, %v635
  %637 = vmatmul.bf16.gmra.mxu0 %v356
  %v638 = vpop.f32.mrf.mxu0
  %v639 = vadd.f32 %v223, %v638
  %v640 = vpop.f32.mrf.mxu0
  %v641 = vadd.f32 %v223, %v640
  %642 = vmatmul.bf16.gmra.mxu0 %v359
  %v643 = vpop.f32.mrf.mxu0
  %v644 = vadd.f32 %v223, %v643
  %v645 = vpop.f32.mrf.mxu0
  %v646 = vadd.f32 %v223, %v645
  %647 = vmatmul.bf16.gmra.mxu0 %v362
  %v648 = vpop.f32.mrf.mxu0
  %v649 = vadd.f32 %v223, %v648
  %v650 = vpop.f32.mrf.mxu0
  %v651 = vadd.f32 %v223, %v650
  %652 = vmatmul.bf16.gmra.mxu0 %v365
  %v653 = vpop.f32.mrf.mxu0
  %v654 = vadd.f32 %v223, %v653
  %v655 = vpop.f32.mrf.mxu0
  %v656 = vadd.f32 %v223, %v655
  %657 = vmatmul.bf16.gmra.mxu0 %v368
  %v658 = vpop.f32.mrf.mxu0
  %v659 = vadd.f32 %v223, %v658
  %v660 = vpop.f32.mrf.mxu0
  %v661 = vadd.f32 %v223, %v660
  %662 = vmatmul.bf16.gmra.mxu0 %v371
  %v663 = vpop.f32.mrf.mxu0
  %v664 = vadd.f32 %v223, %v663
  %v665 = vpop.f32.mrf.mxu0
  %v666 = vadd.f32 %v223, %v665
  %667 = vmatmul.bf16.gmra.mxu0 %v374
  %v668 = vpop.f32.mrf.mxu0
  %v669 = vadd.f32 %v223, %v668
  %v670 = vpop.f32.mrf.mxu0
  %v671 = vadd.f32 %v223, %v670
  %672 = vmatmul.bf16.gmra.mxu0 %v377
  %v673 = vpop.f32.mrf.mxu0
  %v674 = vadd.f32 %v223, %v673
  %v675 = vpop.f32.mrf.mxu0
  %v676 = vadd.f32 %v223, %v675
  %677 = vmatmul.bf16.gmra.mxu0 %v380
  %v678 = vpop.f32.mrf.mxu0
  %v679 = vadd.f32 %v223, %v678
  %v680 = vpop.f32.mrf.mxu0
  %v681 = vadd.f32 %v223, %v680
  %682 = vmatmul.bf16.gmra.mxu0 %v383
  %v683 = vpop.f32.mrf.mxu0
  %v684 = vadd.f32 %v223, %v683
  %v685 = vpop.f32.mrf.mxu0
  %v686 = vadd.f32 %v223, %v685
  %687 = vmatmul.bf16.gmra.mxu0 %v386
  %v688 = vpop.f32.mrf.mxu0
  %v689 = vadd.f32 %v223, %v688
  %v690 = vpop.f32.mrf.mxu0
  %v691 = vadd.f32 %v223, %v690
  %692 = vmatmul.bf16.gmra.mxu0 %v389
  %v693 = vpop.f32.mrf.mxu0
  %v694 = vadd.f32 %v223, %v693
  %v695 = vpop.f32.mrf.mxu0
  %v696 = vadd.f32 %v223, %v695
  %697 = vmatmul.bf16.gmra.mxu0 %v392
  %v698 = vpop.f32.mrf.mxu0
  %v699 = vadd.f32 %v223, %v698
  %v700 = vpop.f32.mrf.mxu0
  %v701 = vadd.f32 %v223, %v700
  %702 = vmatmul.bf16.gmra.mxu0 %v395
  %v703 = vpop.f32.mrf.mxu0
  %v704 = vadd.f32 %v223, %v703
  %v705 = vpop.f32.mrf.mxu0
  %v706 = vadd.f32 %v223, %v705
  %707 = vmatmul.bf16.gmra.mxu0 %v398
  %v708 = vpop.f32.mrf.mxu0
  %v709 = vadd.f32 %v223, %v708
  %v710 = vpop.f32.mrf.mxu0
  %v711 = vadd.f32 %v223, %v710
  %712 = vmatmul.bf16.gmra.mxu0 %v401
  %v713 = vpop.f32.mrf.mxu0
  %v714 = vadd.f32 %v223, %v713
  %v715 = vpop.f32.mrf.mxu0
  %v716 = vadd.f32 %v223, %v715
  %717 = vmatmul.bf16.gmra.mxu0 %v404
  %v718 = vpop.f32.mrf.mxu0
  %v719 = vadd.f32 %v223, %v718
  %v720 = vpop.f32.mrf.mxu0
  %v721 = vadd.f32 %v223, %v720
  %722 = vmatmul.bf16.gmra.mxu0 %v407
  %v723 = vpop.f32.mrf.mxu0
  %v724 = vadd.f32 %v223, %v723
  %v725 = vpop.f32.mrf.mxu0
  %v726 = vadd.f32 %v223, %v725
  %727 = vmatmul.bf16.gmra.mxu0 %v410
  %v728 = vpop.f32.mrf.mxu0
  %v729 = vadd.f32 %v223, %v728
  %v730 = vpop.f32.mrf.mxu0
  %v731 = vadd.f32 %v223, %v730
  %732 = vmatmul.bf16.gmra.mxu0 %v413
  %v733 = vpop.f32.mrf.mxu0
  %v734 = vadd.f32 %v223, %v733
  %v735 = vpop.f32.mrf.mxu0
  %v736 = vadd.f32 %v223, %v735
  %737 = vmatmul.bf16.gmra.mxu0 %v416
  %v738 = vpop.f32.mrf.mxu0
  %v739 = vadd.f32 %v223, %v738
  %v740 = vpop.f32.mrf.mxu0
  %v741 = vadd.f32 %v223, %v740
  %742 = vmatmul.bf16.gmra.mxu0 %v419
  %v743 = vpop.f32.mrf.mxu0
  %v744 = vadd.f32 %v223, %v743
  %v745 = vpop.f32.mrf.mxu0
  %v746 = vadd.f32 %v223, %v745
  %747 = vmatmul.bf16.gmra.mxu0 %v422
  %v748 = vpop.f32.mrf.mxu0
  %v749 = vadd.f32 %v223, %v748
  %v750 = vpop.f32.mrf.mxu0
  %v751 = vadd.f32 %v223, %v750
  %752 = vdwg.mxu0
  %v753 = vtanh.pop %v434
  %v754 = vtanh.pop %v436
  %v755 = vtanh.pop %v439
  %v756 = vtanh.pop %v441
  %v757 = vtanh.pop %v444
  %v758 = vtanh.pop %v446
  %v759 = vtanh.pop %v449
  %v760 = vtanh.pop %v451
  %v761 = vtanh.pop %v454
  %v762 = vtanh.pop %v456
  %v763 = vtanh.pop %v459
  %v764 = vtanh.pop %v461
  %v765 = vtanh.pop %v464
  %v766 = vtanh.pop %v466
  %v767 = vtanh.pop %v469
  %v768 = vtanh.pop %v471
  %v769 = vtanh.pop %v474
  %v770 = vtanh.pop %v476
  %v771 = vtanh.pop %v479
  %v772 = vtanh.pop %v481
  %v773 = vtanh.pop %v484
  %v774 = vtanh.pop %v486
  %v775 = vtanh.pop %v489
  %v776 = vtanh.pop %v491
  %v777 = vtanh.pop %v494
  %v778 = vtanh.pop %v496
  %v779 = vtanh.pop %v499
  %v780 = vtanh.pop %v501
  %v781 = vtanh.pop %v504
  %v782 = vtanh.pop %v506
  %v783 = vtanh.pop %v509
  %v784 = vtanh.pop %v511
  %v785 = vtanh.pop %v514
  %v786 = vtanh.pop %v516
  %v787 = vtanh.pop %v519
  %v788 = vtanh.pop %v521
  %v789 = vtanh.pop %v524
  %v790 = vtanh.pop %v526
  %v791 = vtanh.pop %v529
  %v792 = vtanh.pop %v531
  %v793 = vtanh.pop %v534
  %v794 = vtanh.pop %v536
  %v795 = vtanh.pop %v539
  %v796 = vtanh.pop %v541
  %v797 = vtanh.pop %v544
  %v798 = vtanh.pop %v546
  %v799 = vtanh.pop %v549
  %v800 = vtanh.pop %v551
  %v801 = vtanh.pop %v554
  %v802 = vtanh.pop %v556
  %v803 = vtanh.pop %v559
  %v804 = vtanh.pop %v561
  %v805 = vtanh.pop %v564
  %v806 = vtanh.pop %v566
  %v807 = vtanh.pop %v569
  %v808 = vtanh.pop %v571
  %v809 = vtanh.pop %v574
  %v810 = vtanh.pop %v576
  %v811 = vtanh.pop %v579
  %v812 = vtanh.pop %v581
  %v813 = vtanh.pop %v584
  %v814 = vtanh.pop %v586
  %v815 = vtanh.pop %v589
  %v816 = vtanh.pop %v591
  %v817 = vtanh.pop %v594
  %v818 = vtanh.pop %v596
  %v819 = vtanh.pop %v599
  %v820 = vtanh.pop %v601
  %v821 = vtanh.pop %v604
  %v822 = vtanh.pop %v606
  %v823 = vtanh.pop %v609
  %v824 = vtanh.pop %v611
  %v825 = vtanh.pop %v614
  %v826 = vtanh.pop %v616
  %v827 = vtanh.pop %v619
  %v828 = vtanh.pop %v621
  %v829 = vtanh.pop %v624
  %v830 = vtanh.pop %v626
  %v831 = vtanh.pop %v629
  %v832 = vtanh.pop %v631
  %v833 = vtanh.pop %v634
  %v834 = vtanh.pop %v636
  %v835 = vtanh.pop %v639
  %v836 = vtanh.pop %v641
  %v837 = vtanh.pop %v644
  %v838 = vtanh.pop %v646
  %v839 = vtanh.pop %v649
  %v840 = vtanh.pop %v651
  %v841 = vtanh.pop %v654
  %v842 = vtanh.pop %v656
  %v843 = vtanh.pop %v659
  %v844 = vtanh.pop %v661
  %v845 = vtanh.pop %v664
  %v846 = vtanh.pop %v666
  %v847 = vtanh.pop %v669
  %v848 = vtanh.pop %v671
  %v849 = vtanh.pop %v674
  %v850 = vtanh.pop %v676
  %v851 = vtanh.pop %v679
  %v852 = vtanh.pop %v681
  %v853 = vtanh.pop %v684
  %v854 = vtanh.pop %v686
  %v855 = vtanh.pop %v689
  %v856 = vtanh.pop %v691
  %v857 = vtanh.pop %v694
  %v858 = vtanh.pop %v696
  %v859 = vtanh.pop %v699
  %v860 = vtanh.pop %v701
  %v861 = vtanh.pop %v704
  %v862 = vtanh.pop %v706
  %v863 = vtanh.pop %v709
  %v864 = vtanh.pop %v711
  %v865 = vtanh.pop %v714
  %v866 = vtanh.pop %v716
  %v867 = vtanh.pop %v719
  %v868 = vtanh.pop %v721
  %v869 = vtanh.pop %v724
  %v870 = vtanh.pop %v726
  %v871 = vtanh.pop %v729
  %v872 = vtanh.pop %v731
  %v873 = vtanh.pop %v734
  %v874 = vtanh.pop %v736
  %v875 = vtanh.pop %v739
  %v876 = vtanh.pop %v741
  %v877 = vtanh.pop %v744
  %v878 = vtanh.pop %v746
  %v879 = vtanh.pop %v749
  %v880 = vtanh.pop %v751
  %v881 = vpack.c.bf16 %v754, %v753
  %v882 = vpack.c.bf16 %v756, %v755
  %v883 = vpack.c.bf16 %v758, %v757
  %v884 = vpack.c.bf16 %v760, %v759
  %v885 = vpack.c.bf16 %v762, %v761
  %v886 = vpack.c.bf16 %v764, %v763
  %v887 = vpack.c.bf16 %v766, %v765
  %v888 = vpack.c.bf16 %v768, %v767
  %v889 = vpack.c.bf16 %v770, %v769
  %v890 = vpack.c.bf16 %v772, %v771
  %v891 = vpack.c.bf16 %v774, %v773
  %v892 = vpack.c.bf16 %v776, %v775
  %v893 = vpack.c.bf16 %v778, %v777
  %v894 = vpack.c.bf16 %v780, %v779
  %v895 = vpack.c.bf16 %v782, %v781
  %v896 = vpack.c.bf16 %v784, %v783
  %v897 = vpack.c.bf16 %v786, %v785
  %v898 = vpack.c.bf16 %v788, %v787
  %v899 = vpack.c.bf16 %v790, %v789
  %v900 = vpack.c.bf16 %v792, %v791
  %v901 = vpack.c.bf16 %v794, %v793
  %v902 = vpack.c.bf16 %v796, %v795
  %v903 = vpack.c.bf16 %v798, %v797
  %v904 = vpack.c.bf16 %v800, %v799
  %v905 = vpack.c.bf16 %v802, %v801
  %v906 = vpack.c.bf16 %v804, %v803
  %v907 = vpack.c.bf16 %v806, %v805
  %v908 = vpack.c.bf16 %v808, %v807
  %v909 = vpack.c.bf16 %v810, %v809
  %v910 = vpack.c.bf16 %v812, %v811
  %v911 = vpack.c.bf16 %v814, %v813
  %v912 = vpack.c.bf16 %v816, %v815
  %v913 = vpack.c.bf16 %v818, %v817
  %v914 = vpack.c.bf16 %v820, %v819
  %v915 = vpack.c.bf16 %v822, %v821
  %v916 = vpack.c.bf16 %v824, %v823
  %v917 = vpack.c.bf16 %v826, %v825
  %v918 = vpack.c.bf16 %v828, %v827
  %v919 = vpack.c.bf16 %v830, %v829
  %v920 = vpack.c.bf16 %v832, %v831
  %v921 = vpack.c.bf16 %v834, %v833
  %v922 = vpack.c.bf16 %v836, %v835
  %v923 = vpack.c.bf16 %v838, %v837
  %v924 = vpack.c.bf16 %v840, %v839
  %v925 = vpack.c.bf16 %v842, %v841
  %v926 = vpack.c.bf16 %v844, %v843
  %v927 = vpack.c.bf16 %v846, %v845
  %v928 = vpack.c.bf16 %v848, %v847
  %v929 = vpack.c.bf16 %v850, %v849
  %v930 = vpack.c.bf16 %v852, %v851
  %v931 = vpack.c.bf16 %v854, %v853
  %v932 = vpack.c.bf16 %v856, %v855
  %v933 = vpack.c.bf16 %v858, %v857
  %v934 = vpack.c.bf16 %v860, %v859
  %v935 = vpack.c.bf16 %v862, %v861
  %v936 = vpack.c.bf16 %v864, %v863
  %v937 = vpack.c.bf16 %v866, %v865
  %v938 = vpack.c.bf16 %v868, %v867
  %v939 = vpack.c.bf16 %v870, %v869
  %v940 = vpack.c.bf16 %v872, %v871
  %v941 = vpack.c.bf16 %v874, %v873
  %v942 = vpack.c.bf16 %v876, %v875
  %v943 = vpack.c.bf16 %v878, %v877
  %v944 = vpack.c.bf16 %v880, %v879
  %v945 = vld [vmem:[%s3] sm:$0xf]
  %v946 = vld [vmem:[%s3 + $0x4] sm:$0xf]
  %v947 = vld [vmem:[%s3 + $0x8] sm:$0xf]
  %v948 = vld [vmem:[%s3 + $0xc] sm:$0xf]
  %v949 = vld [vmem:[%s3 + $0x10] sm:$0xf]
  %v950 = vld [vmem:[%s3 + $0x14] sm:$0xf]
  %v951 = vld [vmem:[%s3 + $0x18] sm:$0xf]
  %v952 = vld [vmem:[%s3 + $0x1c] sm:$0xf]
  %v953 = vld [vmem:[%s4] sm:$0x1]
  %v955 = vperm.slane %v953, 0
  %v965 = vunpack.c.l.b16 %v945
  %v966 = vunpack.c.l.b16 %v946
  %v967 = vunpack.c.l.b16 %v947
  %v968 = vunpack.c.l.b16 %v948
  %v969 = vunpack.c.l.b16 %v949
  %v970 = vunpack.c.l.b16 %v950
  %v971 = vunpack.c.l.b16 %v951
  %v972 = vunpack.c.l.b16 %v952
  %v973 = vpack.c.b16 %v966, %v965
  %v974 = vpack.c.b16 %v968, %v967
  %v975 = vpack.c.b16 %v970, %v969
  %v976 = vpack.c.b16 %v972, %v971
  %vm981 = vcmask 523264
  %v983 = vsel %vm981, %v881, 0
  %v986 = vsel %vm981, %v882, 0
  %v989 = vsel %vm981, %v883, 0
  %v992 = vsel %vm981, %v884, 0
  %v995 = vsel %vm981, %v885, 0
  %v998 = vsel %vm981, %v886, 0
  %v1001 = vsel %vm981, %v887, 0
  %v1004 = vsel %vm981, %v888, 0
  %v1007 = vsel %vm981, %v889, 0
  %v1010 = vsel %vm981, %v890, 0
  %v1013 = vsel %vm981, %v891, 0
  %v1016 = vsel %vm981, %v892, 0
  %v1019 = vsel %vm981, %v893, 0
  %v1022 = vsel %vm981, %v894, 0
  %v1025 = vsel %vm981, %v895, 0
  %v1028 = vsel %vm981, %v896, 0
  %v1031 = vsel %vm981, %v897, 0
  %v1034 = vsel %vm981, %v898, 0
  %v1037 = vsel %vm981, %v899, 0
  %v1040 = vsel %vm981, %v900, 0
  %v1043 = vsel %vm981, %v901, 0
  %v1046 = vsel %vm981, %v902, 0
  %v1049 = vsel %vm981, %v903, 0
  %v1052 = vsel %vm981, %v904, 0
  %v1055 = vsel %vm981, %v905, 0
  %v1058 = vsel %vm981, %v906, 0
  %v1061 = vsel %vm981, %v907, 0
  %v1064 = vsel %vm981, %v908, 0
  %v1067 = vsel %vm981, %v909, 0
  %v1070 = vsel %vm981, %v910, 0
  %v1073 = vsel %vm981, %v911, 0
  %v1076 = vsel %vm981, %v912, 0
  %v1079 = vsel %vm981, %v913, 0
  %v1082 = vsel %vm981, %v914, 0
  %v1085 = vsel %vm981, %v915, 0
  %v1088 = vsel %vm981, %v916, 0
  %v1091 = vsel %vm981, %v917, 0
  %v1094 = vsel %vm981, %v918, 0
  %v1097 = vsel %vm981, %v919, 0
  %v1100 = vsel %vm981, %v920, 0
  %v1103 = vsel %vm981, %v921, 0
  %v1106 = vsel %vm981, %v922, 0
  %v1109 = vsel %vm981, %v923, 0
  %v1112 = vsel %vm981, %v924, 0
  %v1115 = vsel %vm981, %v925, 0
  %v1118 = vsel %vm981, %v926, 0
  %v1121 = vsel %vm981, %v927, 0
  %v1124 = vsel %vm981, %v928, 0
  %v1127 = vsel %vm981, %v929, 0
  %v1130 = vsel %vm981, %v930, 0
  %v1133 = vsel %vm981, %v931, 0
  %v1136 = vsel %vm981, %v932, 0
  %v1139 = vsel %vm981, %v933, 0
  %v1142 = vsel %vm981, %v934, 0
  %v1145 = vsel %vm981, %v935, 0
  %v1148 = vsel %vm981, %v936, 0
  %v1151 = vsel %vm981, %v937, 0
  %v1154 = vsel %vm981, %v938, 0
  %v1157 = vsel %vm981, %v939, 0
  %v1160 = vsel %vm981, %v940, 0
  %v1163 = vsel %vm981, %v941, 0
  %v1166 = vsel %vm981, %v942, 0
  %v1169 = vsel %vm981, %v943, 0
  %v1172 = vsel %vm981, %v944, 0
  %1174 = vmatpush.bf16.msra.mxu0 0
  %1175 = vmatpush.bf16.msra.mxu0 0
  %1176 = vmatpush.bf16.msra.mxu0 0
  %1177 = vmatpush.bf16.msra.mxu0 0
  %1178 = vmatpush.bf16.msra.mxu0 %v976
  %1179 = vmatpush.bf16.msra.mxu0 %v975
  %1180 = vmatpush.bf16.msra.mxu0 %v974
  %1181 = vmatpush.bf16.msra.mxu0 %v973
  %1182 = vmatmul.bf16.gmra.mxu0 %v983
  %v1183 = vpop.f32.mrf.mxu0
  %v1184 = vadd.f32 %v955, %v1183
  %v1185 = vpop.f32.mrf.mxu0
  %v1186 = vadd.f32 %v955, %v1185
  %1187 = vmatmul.bf16.gmra.mxu0 %v986
  %v1188 = vpop.f32.mrf.mxu0
  %v1189 = vadd.f32 %v955, %v1188
  %v1190 = vpop.f32.mrf.mxu0
  %v1191 = vadd.f32 %v955, %v1190
  %1192 = vmatmul.bf16.gmra.mxu0 %v989
  %v1193 = vpop.f32.mrf.mxu0
  %v1194 = vadd.f32 %v955, %v1193
  %v1195 = vpop.f32.mrf.mxu0
  %v1196 = vadd.f32 %v955, %v1195
  %1197 = vmatmul.bf16.gmra.mxu0 %v992
  %v1198 = vpop.f32.mrf.mxu0
  %v1199 = vadd.f32 %v955, %v1198
  %v1200 = vpop.f32.mrf.mxu0
  %v1201 = vadd.f32 %v955, %v1200
  %1202 = vmatmul.bf16.gmra.mxu0 %v995
  %v1203 = vpop.f32.mrf.mxu0
  %v1204 = vadd.f32 %v955, %v1203
  %v1205 = vpop.f32.mrf.mxu0
  %v1206 = vadd.f32 %v955, %v1205
  %1207 = vmatmul.bf16.gmra.mxu0 %v998
  %v1208 = vpop.f32.mrf.mxu0
  %v1209 = vadd.f32 %v955, %v1208
  %v1210 = vpop.f32.mrf.mxu0
  %v1211 = vadd.f32 %v955, %v1210
  %1212 = vmatmul.bf16.gmra.mxu0 %v1001
  %v1213 = vpop.f32.mrf.mxu0
  %v1214 = vadd.f32 %v955, %v1213
  %v1215 = vpop.f32.mrf.mxu0
  %v1216 = vadd.f32 %v955, %v1215
  %1217 = vmatmul.bf16.gmra.mxu0 %v1004
  %v1218 = vpop.f32.mrf.mxu0
  %v1219 = vadd.f32 %v955, %v1218
  %v1220 = vpop.f32.mrf.mxu0
  %v1221 = vadd.f32 %v955, %v1220
  %1222 = vmatmul.bf16.gmra.mxu0 %v1007
  %v1223 = vpop.f32.mrf.mxu0
  %v1224 = vadd.f32 %v955, %v1223
  %v1225 = vpop.f32.mrf.mxu0
  %v1226 = vadd.f32 %v955, %v1225
  %1227 = vmatmul.bf16.gmra.mxu0 %v1010
  %v1228 = vpop.f32.mrf.mxu0
  %v1229 = vadd.f32 %v955, %v1228
  %v1230 = vpop.f32.mrf.mxu0
  %v1231 = vadd.f32 %v955, %v1230
  %1232 = vmatmul.bf16.gmra.mxu0 %v1013
  %v1233 = vpop.f32.mrf.mxu0
  %v1234 = vadd.f32 %v955, %v1233
  %v1235 = vpop.f32.mrf.mxu0
  %v1236 = vadd.f32 %v955, %v1235
  %1237 = vmatmul.bf16.gmra.mxu0 %v1016
  %v1238 = vpop.f32.mrf.mxu0
  %v1239 = vadd.f32 %v955, %v1238
  %v1240 = vpop.f32.mrf.mxu0
  %v1241 = vadd.f32 %v955, %v1240
  %1242 = vmatmul.bf16.gmra.mxu0 %v1019
  %v1243 = vpop.f32.mrf.mxu0
  %v1244 = vadd.f32 %v955, %v1243
  %v1245 = vpop.f32.mrf.mxu0
  %v1246 = vadd.f32 %v955, %v1245
  %1247 = vmatmul.bf16.gmra.mxu0 %v1022
  %v1248 = vpop.f32.mrf.mxu0
  %v1249 = vadd.f32 %v955, %v1248
  %v1250 = vpop.f32.mrf.mxu0
  %v1251 = vadd.f32 %v955, %v1250
  %1252 = vmatmul.bf16.gmra.mxu0 %v1025
  %v1253 = vpop.f32.mrf.mxu0
  %v1254 = vadd.f32 %v955, %v1253
  %v1255 = vpop.f32.mrf.mxu0
  %v1256 = vadd.f32 %v955, %v1255
  %1257 = vmatmul.bf16.gmra.mxu0 %v1028
  %v1258 = vpop.f32.mrf.mxu0
  %v1259 = vadd.f32 %v955, %v1258
  %v1260 = vpop.f32.mrf.mxu0
  %v1261 = vadd.f32 %v955, %v1260
  %1262 = vmatmul.bf16.gmra.mxu0 %v1031
  %v1263 = vpop.f32.mrf.mxu0
  %v1264 = vadd.f32 %v955, %v1263
  %v1265 = vpop.f32.mrf.mxu0
  %v1266 = vadd.f32 %v955, %v1265
  %1267 = vmatmul.bf16.gmra.mxu0 %v1034
  %v1268 = vpop.f32.mrf.mxu0
  %v1269 = vadd.f32 %v955, %v1268
  %v1270 = vpop.f32.mrf.mxu0
  %v1271 = vadd.f32 %v955, %v1270
  %1272 = vmatmul.bf16.gmra.mxu0 %v1037
  %v1273 = vpop.f32.mrf.mxu0
  %v1274 = vadd.f32 %v955, %v1273
  %v1275 = vpop.f32.mrf.mxu0
  %v1276 = vadd.f32 %v955, %v1275
  %1277 = vmatmul.bf16.gmra.mxu0 %v1040
  %v1278 = vpop.f32.mrf.mxu0
  %v1279 = vadd.f32 %v955, %v1278
  %v1280 = vpop.f32.mrf.mxu0
  %v1281 = vadd.f32 %v955, %v1280
  %1282 = vmatmul.bf16.gmra.mxu0 %v1043
  %v1283 = vpop.f32.mrf.mxu0
  %v1284 = vadd.f32 %v955, %v1283
  %v1285 = vpop.f32.mrf.mxu0
  %v1286 = vadd.f32 %v955, %v1285
  %1287 = vmatmul.bf16.gmra.mxu0 %v1046
  %v1288 = vpop.f32.mrf.mxu0
  %v1289 = vadd.f32 %v955, %v1288
  %v1290 = vpop.f32.mrf.mxu0
  %v1291 = vadd.f32 %v955, %v1290
  %1292 = vmatmul.bf16.gmra.mxu0 %v1049
  %v1293 = vpop.f32.mrf.mxu0
  %v1294 = vadd.f32 %v955, %v1293
  %v1295 = vpop.f32.mrf.mxu0
  %v1296 = vadd.f32 %v955, %v1295
  %1297 = vmatmul.bf16.gmra.mxu0 %v1052
  %v1298 = vpop.f32.mrf.mxu0
  %v1299 = vadd.f32 %v955, %v1298
  %v1300 = vpop.f32.mrf.mxu0
  %v1301 = vadd.f32 %v955, %v1300
  %1302 = vmatmul.bf16.gmra.mxu0 %v1055
  %v1303 = vpop.f32.mrf.mxu0
  %v1304 = vadd.f32 %v955, %v1303
  %v1305 = vpop.f32.mrf.mxu0
  %v1306 = vadd.f32 %v955, %v1305
  %1307 = vmatmul.bf16.gmra.mxu0 %v1058
  %v1308 = vpop.f32.mrf.mxu0
  %v1309 = vadd.f32 %v955, %v1308
  %v1310 = vpop.f32.mrf.mxu0
  %v1311 = vadd.f32 %v955, %v1310
  %1312 = vmatmul.bf16.gmra.mxu0 %v1061
  %v1313 = vpop.f32.mrf.mxu0
  %v1314 = vadd.f32 %v955, %v1313
  %v1315 = vpop.f32.mrf.mxu0
  %v1316 = vadd.f32 %v955, %v1315
  %1317 = vmatmul.bf16.gmra.mxu0 %v1064
  %v1318 = vpop.f32.mrf.mxu0
  %v1319 = vadd.f32 %v955, %v1318
  %v1320 = vpop.f32.mrf.mxu0
  %v1321 = vadd.f32 %v955, %v1320
  %1322 = vmatmul.bf16.gmra.mxu0 %v1067
  %v1323 = vpop.f32.mrf.mxu0
  %v1324 = vadd.f32 %v955, %v1323
  %v1325 = vpop.f32.mrf.mxu0
  %v1326 = vadd.f32 %v955, %v1325
  %1327 = vmatmul.bf16.gmra.mxu0 %v1070
  %v1328 = vpop.f32.mrf.mxu0
  %v1329 = vadd.f32 %v955, %v1328
  %v1330 = vpop.f32.mrf.mxu0
  %v1331 = vadd.f32 %v955, %v1330
  %1332 = vmatmul.bf16.gmra.mxu0 %v1073
  %v1333 = vpop.f32.mrf.mxu0
  %v1334 = vadd.f32 %v955, %v1333
  %v1335 = vpop.f32.mrf.mxu0
  %v1336 = vadd.f32 %v955, %v1335
  %1337 = vmatmul.bf16.gmra.mxu0 %v1076
  %v1338 = vpop.f32.mrf.mxu0
  %v1339 = vadd.f32 %v955, %v1338
  %v1340 = vpop.f32.mrf.mxu0
  %v1341 = vadd.f32 %v955, %v1340
  %1342 = vmatmul.bf16.gmra.mxu0 %v1079
  %v1343 = vpop.f32.mrf.mxu0
  %v1344 = vadd.f32 %v955, %v1343
  %v1345 = vpop.f32.mrf.mxu0
  %v1346 = vadd.f32 %v955, %v1345
  %1347 = vmatmul.bf16.gmra.mxu0 %v1082
  %v1348 = vpop.f32.mrf.mxu0
  %v1349 = vadd.f32 %v955, %v1348
  %v1350 = vpop.f32.mrf.mxu0
  %v1351 = vadd.f32 %v955, %v1350
  %1352 = vmatmul.bf16.gmra.mxu0 %v1085
  %v1353 = vpop.f32.mrf.mxu0
  %v1354 = vadd.f32 %v955, %v1353
  %v1355 = vpop.f32.mrf.mxu0
  %v1356 = vadd.f32 %v955, %v1355
  %1357 = vmatmul.bf16.gmra.mxu0 %v1088
  %v1358 = vpop.f32.mrf.mxu0
  %v1359 = vadd.f32 %v955, %v1358
  %v1360 = vpop.f32.mrf.mxu0
  %v1361 = vadd.f32 %v955, %v1360
  %1362 = vmatmul.bf16.gmra.mxu0 %v1091
  %v1363 = vpop.f32.mrf.mxu0
  %v1364 = vadd.f32 %v955, %v1363
  %v1365 = vpop.f32.mrf.mxu0
  %v1366 = vadd.f32 %v955, %v1365
  %1367 = vmatmul.bf16.gmra.mxu0 %v1094
  %v1368 = vpop.f32.mrf.mxu0
  %v1369 = vadd.f32 %v955, %v1368
  %v1370 = vpop.f32.mrf.mxu0
  %v1371 = vadd.f32 %v955, %v1370
  %1372 = vmatmul.bf16.gmra.mxu0 %v1097
  %v1373 = vpop.f32.mrf.mxu0
  %v1374 = vadd.f32 %v955, %v1373
  %v1375 = vpop.f32.mrf.mxu0
  %v1376 = vadd.f32 %v955, %v1375
  %1377 = vmatmul.bf16.gmra.mxu0 %v1100
  %v1378 = vpop.f32.mrf.mxu0
  %v1379 = vadd.f32 %v955, %v1378
  %v1380 = vpop.f32.mrf.mxu0
  %v1381 = vadd.f32 %v955, %v1380
  %1382 = vmatmul.bf16.gmra.mxu0 %v1103
  %v1383 = vpop.f32.mrf.mxu0
  %v1384 = vadd.f32 %v955, %v1383
  %v1385 = vpop.f32.mrf.mxu0
  %v1386 = vadd.f32 %v955, %v1385
  %1387 = vmatmul.bf16.gmra.mxu0 %v1106
  %v1388 = vpop.f32.mrf.mxu0
  %v1389 = vadd.f32 %v955, %v1388
  %v1390 = vpop.f32.mrf.mxu0
  %v1391 = vadd.f32 %v955, %v1390
  %1392 = vmatmul.bf16.gmra.mxu0 %v1109
  %v1393 = vpop.f32.mrf.mxu0
  %v1394 = vadd.f32 %v955, %v1393
  %v1395 = vpop.f32.mrf.mxu0
  %v1396 = vadd.f32 %v955, %v1395
  %1397 = vmatmul.bf16.gmra.mxu0 %v1112
  %v1398 = vpop.f32.mrf.mxu0
  %v1399 = vadd.f32 %v955, %v1398
  %v1400 = vpop.f32.mrf.mxu0
  %v1401 = vadd.f32 %v955, %v1400
  %1402 = vmatmul.bf16.gmra.mxu0 %v1115
  %v1403 = vpop.f32.mrf.mxu0
  %v1404 = vadd.f32 %v955, %v1403
  %v1405 = vpop.f32.mrf.mxu0
  %v1406 = vadd.f32 %v955, %v1405
  %1407 = vmatmul.bf16.gmra.mxu0 %v1118
  %v1408 = vpop.f32.mrf.mxu0
  %v1409 = vadd.f32 %v955, %v1408
  %v1410 = vpop.f32.mrf.mxu0
  %v1411 = vadd.f32 %v955, %v1410
  %1412 = vmatmul.bf16.gmra.mxu0 %v1121
  %v1413 = vpop.f32.mrf.mxu0
  %v1414 = vadd.f32 %v955, %v1413
  %v1415 = vpop.f32.mrf.mxu0
  %v1416 = vadd.f32 %v955, %v1415
  %1417 = vmatmul.bf16.gmra.mxu0 %v1124
  %v1418 = vpop.f32.mrf.mxu0
  %v1419 = vadd.f32 %v955, %v1418
  %v1420 = vpop.f32.mrf.mxu0
  %v1421 = vadd.f32 %v955, %v1420
  %1422 = vmatmul.bf16.gmra.mxu0 %v1127
  %v1423 = vpop.f32.mrf.mxu0
  %v1424 = vadd.f32 %v955, %v1423
  %v1425 = vpop.f32.mrf.mxu0
  %v1426 = vadd.f32 %v955, %v1425
  %1427 = vmatmul.bf16.gmra.mxu0 %v1130
  %v1428 = vpop.f32.mrf.mxu0
  %v1429 = vadd.f32 %v955, %v1428
  %v1430 = vpop.f32.mrf.mxu0
  %v1431 = vadd.f32 %v955, %v1430
  %1432 = vmatmul.bf16.gmra.mxu0 %v1133
  %v1433 = vpop.f32.mrf.mxu0
  %v1434 = vadd.f32 %v955, %v1433
  %v1435 = vpop.f32.mrf.mxu0
  %v1436 = vadd.f32 %v955, %v1435
  %1437 = vmatmul.bf16.gmra.mxu0 %v1136
  %v1438 = vpop.f32.mrf.mxu0
  %v1439 = vadd.f32 %v955, %v1438
  %v1440 = vpop.f32.mrf.mxu0
  %v1441 = vadd.f32 %v955, %v1440
  %1442 = vmatmul.bf16.gmra.mxu0 %v1139
  %v1443 = vpop.f32.mrf.mxu0
  %v1444 = vadd.f32 %v955, %v1443
  %v1445 = vpop.f32.mrf.mxu0
  %v1446 = vadd.f32 %v955, %v1445
  %1447 = vmatmul.bf16.gmra.mxu0 %v1142
  %v1448 = vpop.f32.mrf.mxu0
  %v1449 = vadd.f32 %v955, %v1448
  %v1450 = vpop.f32.mrf.mxu0
  %v1451 = vadd.f32 %v955, %v1450
  %1452 = vmatmul.bf16.gmra.mxu0 %v1145
  %v1453 = vpop.f32.mrf.mxu0
  %v1454 = vadd.f32 %v955, %v1453
  %v1455 = vpop.f32.mrf.mxu0
  %v1456 = vadd.f32 %v955, %v1455
  %1457 = vmatmul.bf16.gmra.mxu0 %v1148
  %v1458 = vpop.f32.mrf.mxu0
  %v1459 = vadd.f32 %v955, %v1458
  %v1460 = vpop.f32.mrf.mxu0
  %v1461 = vadd.f32 %v955, %v1460
  %1462 = vmatmul.bf16.gmra.mxu0 %v1151
  %v1463 = vpop.f32.mrf.mxu0
  %v1464 = vadd.f32 %v955, %v1463
  %v1465 = vpop.f32.mrf.mxu0
  %v1466 = vadd.f32 %v955, %v1465
  %1467 = vmatmul.bf16.gmra.mxu0 %v1154
  %v1468 = vpop.f32.mrf.mxu0
  %v1469 = vadd.f32 %v955, %v1468
  %v1470 = vpop.f32.mrf.mxu0
  %v1471 = vadd.f32 %v955, %v1470
  %1472 = vmatmul.bf16.gmra.mxu0 %v1157
  %v1473 = vpop.f32.mrf.mxu0
  %v1474 = vadd.f32 %v955, %v1473
  %v1475 = vpop.f32.mrf.mxu0
  %v1476 = vadd.f32 %v955, %v1475
  %1477 = vmatmul.bf16.gmra.mxu0 %v1160
  %v1478 = vpop.f32.mrf.mxu0
  %v1479 = vadd.f32 %v955, %v1478
  %v1480 = vpop.f32.mrf.mxu0
  %v1481 = vadd.f32 %v955, %v1480
  %1482 = vmatmul.bf16.gmra.mxu0 %v1163
  %v1483 = vpop.f32.mrf.mxu0
  %v1484 = vadd.f32 %v955, %v1483
  %v1485 = vpop.f32.mrf.mxu0
  %v1486 = vadd.f32 %v955, %v1485
  %1487 = vmatmul.bf16.gmra.mxu0 %v1166
  %v1488 = vpop.f32.mrf.mxu0
  %v1489 = vadd.f32 %v955, %v1488
  %v1490 = vpop.f32.mrf.mxu0
  %v1491 = vadd.f32 %v955, %v1490
  %1492 = vmatmul.bf16.gmra.mxu0 %v1169
  %v1493 = vpop.f32.mrf.mxu0
  %v1494 = vadd.f32 %v955, %v1493
  %v1495 = vpop.f32.mrf.mxu0
  %v1496 = vadd.f32 %v955, %v1495
  %1497 = vmatmul.bf16.gmra.mxu0 %v1172
  %v1498 = vpop.f32.mrf.mxu0
  %v1499 = vadd.f32 %v955, %v1498
  %v1500 = vpop.f32.mrf.mxu0
  %v1501 = vadd.f32 %v955, %v1500
  %1502 = vdwg.mxu0
  %v1503 = vtanh.pop %v1184
  %v1504 = vtanh.pop %v1186
  %v1505 = vtanh.pop %v1189
  %v1506 = vtanh.pop %v1191
  %v1507 = vtanh.pop %v1194
  %v1508 = vtanh.pop %v1196
  %v1509 = vtanh.pop %v1199
  %v1510 = vtanh.pop %v1201
  %v1511 = vtanh.pop %v1204
  %v1512 = vtanh.pop %v1206
  %v1513 = vtanh.pop %v1209
  %v1514 = vtanh.pop %v1211
  %v1515 = vtanh.pop %v1214
  %v1516 = vtanh.pop %v1216
  %v1517 = vtanh.pop %v1219
  %v1518 = vtanh.pop %v1221
  %v1519 = vtanh.pop %v1224
  %v1520 = vtanh.pop %v1226
  %v1521 = vtanh.pop %v1229
  %v1522 = vtanh.pop %v1231
  %v1523 = vtanh.pop %v1234
  %v1524 = vtanh.pop %v1236
  %v1525 = vtanh.pop %v1239
  %v1526 = vtanh.pop %v1241
  %v1527 = vtanh.pop %v1244
  %v1528 = vtanh.pop %v1246
  %v1529 = vtanh.pop %v1249
  %v1530 = vtanh.pop %v1251
  %v1531 = vtanh.pop %v1254
  %v1532 = vtanh.pop %v1256
  %v1533 = vtanh.pop %v1259
  %v1534 = vtanh.pop %v1261
  %v1535 = vtanh.pop %v1264
  %v1536 = vtanh.pop %v1266
  %v1537 = vtanh.pop %v1269
  %v1538 = vtanh.pop %v1271
  %v1539 = vtanh.pop %v1274
  %v1540 = vtanh.pop %v1276
  %v1541 = vtanh.pop %v1279
  %v1542 = vtanh.pop %v1281
  %v1543 = vtanh.pop %v1284
  %v1544 = vtanh.pop %v1286
  %v1545 = vtanh.pop %v1289
  %v1546 = vtanh.pop %v1291
  %v1547 = vtanh.pop %v1294
  %v1548 = vtanh.pop %v1296
  %v1549 = vtanh.pop %v1299
  %v1550 = vtanh.pop %v1301
  %v1551 = vtanh.pop %v1304
  %v1552 = vtanh.pop %v1306
  %v1553 = vtanh.pop %v1309
  %v1554 = vtanh.pop %v1311
  %v1555 = vtanh.pop %v1314
  %v1556 = vtanh.pop %v1316
  %v1557 = vtanh.pop %v1319
  %v1558 = vtanh.pop %v1321
  %v1559 = vtanh.pop %v1324
  %v1560 = vtanh.pop %v1326
  %v1561 = vtanh.pop %v1329
  %v1562 = vtanh.pop %v1331
  %v1563 = vtanh.pop %v1334
  %v1564 = vtanh.pop %v1336
  %v1565 = vtanh.pop %v1339
  %v1566 = vtanh.pop %v1341
  %v1567 = vtanh.pop %v1344
  %v1568 = vtanh.pop %v1346
  %v1569 = vtanh.pop %v1349
  %v1570 = vtanh.pop %v1351
  %v1571 = vtanh.pop %v1354
  %v1572 = vtanh.pop %v1356
  %v1573 = vtanh.pop %v1359
  %v1574 = vtanh.pop %v1361
  %v1575 = vtanh.pop %v1364
  %v1576 = vtanh.pop %v1366
  %v1577 = vtanh.pop %v1369
  %v1578 = vtanh.pop %v1371
  %v1579 = vtanh.pop %v1374
  %v1580 = vtanh.pop %v1376
  %v1581 = vtanh.pop %v1379
  %v1582 = vtanh.pop %v1381
  %v1583 = vtanh.pop %v1384
  %v1584 = vtanh.pop %v1386
  %v1585 = vtanh.pop %v1389
  %v1586 = vtanh.pop %v1391
  %v1587 = vtanh.pop %v1394
  %v1588 = vtanh.pop %v1396
  %v1589 = vtanh.pop %v1399
  %v1590 = vtanh.pop %v1401
  %v1591 = vtanh.pop %v1404
  %v1592 = vtanh.pop %v1406
  %v1593 = vtanh.pop %v1409
  %v1594 = vtanh.pop %v1411
  %v1595 = vtanh.pop %v1414
  %v1596 = vtanh.pop %v1416
  %v1597 = vtanh.pop %v1419
  %v1598 = vtanh.pop %v1421
  %v1599 = vtanh.pop %v1424
  %v1600 = vtanh.pop %v1426
  %v1601 = vtanh.pop %v1429
  %v1602 = vtanh.pop %v1431
  %v1603 = vtanh.pop %v1434
  %v1604 = vtanh.pop %v1436
  %v1605 = vtanh.pop %v1439
  %v1606 = vtanh.pop %v1441
  %v1607 = vtanh.pop %v1444
  %v1608 = vtanh.pop %v1446
  %v1609 = vtanh.pop %v1449
  %v1610 = vtanh.pop %v1451
  %v1611 = vtanh.pop %v1454
  %v1612 = vtanh.pop %v1456
  %v1613 = vtanh.pop %v1459
  %v1614 = vtanh.pop %v1461
  %v1615 = vtanh.pop %v1464
  %v1616 = vtanh.pop %v1466
  %v1617 = vtanh.pop %v1469
  %v1618 = vtanh.pop %v1471
  %v1619 = vtanh.pop %v1474
  %v1620 = vtanh.pop %v1476
  %v1621 = vtanh.pop %v1479
  %v1622 = vtanh.pop %v1481
  %v1623 = vtanh.pop %v1484
  %v1624 = vtanh.pop %v1486
  %v1625 = vtanh.pop %v1489
  %v1626 = vtanh.pop %v1491
  %v1627 = vtanh.pop %v1494
  %v1628 = vtanh.pop %v1496
  %v1629 = vtanh.pop %v1499
  %v1630 = vtanh.pop %v1501
  %v1631 = vpack.c.bf16 %v1504, %v1503
  %v1632 = vpack.c.bf16 %v1506, %v1505
  %v1633 = vpack.c.bf16 %v1508, %v1507
  %v1634 = vpack.c.bf16 %v1510, %v1509
  %v1635 = vpack.c.bf16 %v1512, %v1511
  %v1636 = vpack.c.bf16 %v1514, %v1513
  %v1637 = vpack.c.bf16 %v1516, %v1515
  %v1638 = vpack.c.bf16 %v1518, %v1517
  %v1639 = vpack.c.bf16 %v1520, %v1519
  %v1640 = vpack.c.bf16 %v1522, %v1521
  %v1641 = vpack.c.bf16 %v1524, %v1523
  %v1642 = vpack.c.bf16 %v1526, %v1525
  %v1643 = vpack.c.bf16 %v1528, %v1527
  %v1644 = vpack.c.bf16 %v1530, %v1529
  %v1645 = vpack.c.bf16 %v1532, %v1531
  %v1646 = vpack.c.bf16 %v1534, %v1533
  %v1647 = vpack.c.bf16 %v1536, %v1535
  %v1648 = vpack.c.bf16 %v1538, %v1537
  %v1649 = vpack.c.bf16 %v1540, %v1539
  %v1650 = vpack.c.bf16 %v1542, %v1541
  %v1651 = vpack.c.bf16 %v1544, %v1543
  %v1652 = vpack.c.bf16 %v1546, %v1545
  %v1653 = vpack.c.bf16 %v1548, %v1547
  %v1654 = vpack.c.bf16 %v1550, %v1549
  %v1655 = vpack.c.bf16 %v1552, %v1551
  %v1656 = vpack.c.bf16 %v1554, %v1553
  %v1657 = vpack.c.bf16 %v1556, %v1555
  %v1658 = vpack.c.bf16 %v1558, %v1557
  %v1659 = vpack.c.bf16 %v1560, %v1559
  %v1660 = vpack.c.bf16 %v1562, %v1561
  %v1661 = vpack.c.bf16 %v1564, %v1563
  %v1662 = vpack.c.bf16 %v1566, %v1565
  %v1663 = vpack.c.bf16 %v1568, %v1567
  %v1664 = vpack.c.bf16 %v1570, %v1569
  %v1665 = vpack.c.bf16 %v1572, %v1571
  %v1666 = vpack.c.bf16 %v1574, %v1573
  %v1667 = vpack.c.bf16 %v1576, %v1575
  %v1668 = vpack.c.bf16 %v1578, %v1577
  %v1669 = vpack.c.bf16 %v1580, %v1579
  %v1670 = vpack.c.bf16 %v1582, %v1581
  %v1671 = vpack.c.bf16 %v1584, %v1583
  %v1672 = vpack.c.bf16 %v1586, %v1585
  %v1673 = vpack.c.bf16 %v1588, %v1587
  %v1674 = vpack.c.bf16 %v1590, %v1589
  %v1675 = vpack.c.bf16 %v1592, %v1591
  %v1676 = vpack.c.bf16 %v1594, %v1593
  %v1677 = vpack.c.bf16 %v1596, %v1595
  %v1678 = vpack.c.bf16 %v1598, %v1597
  %v1679 = vpack.c.bf16 %v1600, %v1599
  %v1680 = vpack.c.bf16 %v1602, %v1601
  %v1681 = vpack.c.bf16 %v1604, %v1603
  %v1682 = vpack.c.bf16 %v1606, %v1605
  %v1683 = vpack.c.bf16 %v1608, %v1607
  %v1684 = vpack.c.bf16 %v1610, %v1609
  %v1685 = vpack.c.bf16 %v1612, %v1611
  %v1686 = vpack.c.bf16 %v1614, %v1613
  %v1687 = vpack.c.bf16 %v1616, %v1615
  %v1688 = vpack.c.bf16 %v1618, %v1617
  %v1689 = vpack.c.bf16 %v1620, %v1619
  %v1690 = vpack.c.bf16 %v1622, %v1621
  %v1691 = vpack.c.bf16 %v1624, %v1623
  %v1692 = vpack.c.bf16 %v1626, %v1625
  %v1693 = vpack.c.bf16 %v1628, %v1627
  %v1694 = vpack.c.bf16 %v1630, %v1629
  %v1695 = vld [vmem:[%s5] sm:$0xf]
  %v1696 = vld [vmem:[%s5 + $0x4] sm:$0xf]
  %v1697 = vld [vmem:[%s5 + $0x8] sm:$0xf]
  %v1698 = vld [vmem:[%s5 + $0xc] sm:$0xf]
  %v1699 = vld [vmem:[%s5 + $0x10] sm:$0xf]
  %v1700 = vld [vmem:[%s5 + $0x14] sm:$0xf]
  %v1701 = vld [vmem:[%s5 + $0x18] sm:$0xf]
  %v1702 = vld [vmem:[%s5 + $0x1c] sm:$0xf]
  %v1703 = vld [vmem:[%s6] sm:$0x1]
  %v1705 = vperm.slane %v1703, 0
  %v1715 = vunpack.c.l.b16 %v1695
  %v1716 = vunpack.c.l.b16 %v1696
  %v1717 = vunpack.c.l.b16 %v1697
  %v1718 = vunpack.c.l.b16 %v1698
  %v1719 = vunpack.c.l.b16 %v1699
  %v1720 = vunpack.c.l.b16 %v1700
  %v1721 = vunpack.c.l.b16 %v1701
  %v1722 = vunpack.c.l.b16 %v1702
  %v1723 = vpack.c.b16 %v1716, %v1715
  %v1724 = vpack.c.b16 %v1718, %v1717
  %v1725 = vpack.c.b16 %v1720, %v1719
  %v1726 = vpack.c.b16 %v1722, %v1721
  %v1732 = vsel %vm981, %v1631, 0
  %v1735 = vsel %vm981, %v1632, 0
  %v1738 = vsel %vm981, %v1633, 0
  %v1741 = vsel %vm981, %v1634, 0
  %v1744 = vsel %vm981, %v1635, 0
  %v1747 = vsel %vm981, %v1636, 0
  %v1750 = vsel %vm981, %v1637, 0
  %v1753 = vsel %vm981, %v1638, 0
  %v1756 = vsel %vm981, %v1639, 0
  %v1759 = vsel %vm981, %v1640, 0
  %v1762 = vsel %vm981, %v1641, 0
  %v1765 = vsel %vm981, %v1642, 0
  %v1768 = vsel %vm981, %v1643, 0
  %v1771 = vsel %vm981, %v1644, 0
  %v1774 = vsel %vm981, %v1645, 0
  %v1777 = vsel %vm981, %v1646, 0
  %v1780 = vsel %vm981, %v1647, 0
  %v1783 = vsel %vm981, %v1648, 0
  %v1786 = vsel %vm981, %v1649, 0
  %v1789 = vsel %vm981, %v1650, 0
  %v1792 = vsel %vm981, %v1651, 0
  %v1795 = vsel %vm981, %v1652, 0
  %v1798 = vsel %vm981, %v1653, 0
  %v1801 = vsel %vm981, %v1654, 0
  %v1804 = vsel %vm981, %v1655, 0
  %v1807 = vsel %vm981, %v1656, 0
  %v1810 = vsel %vm981, %v1657, 0
  %v1813 = vsel %vm981, %v1658, 0
  %v1816 = vsel %vm981, %v1659, 0
  %v1819 = vsel %vm981, %v1660, 0
  %v1822 = vsel %vm981, %v1661, 0
  %v1825 = vsel %vm981, %v1662, 0
  %v1828 = vsel %vm981, %v1663, 0
  %v1831 = vsel %vm981, %v1664, 0
  %v1834 = vsel %vm981, %v1665, 0
  %v1837 = vsel %vm981, %v1666, 0
  %v1840 = vsel %vm981, %v1667, 0
  %v1843 = vsel %vm981, %v1668, 0
  %v1846 = vsel %vm981, %v1669, 0
  %v1849 = vsel %vm981, %v1670, 0
  %v1852 = vsel %vm981, %v1671, 0
  %v1855 = vsel %vm981, %v1672, 0
  %v1858 = vsel %vm981, %v1673, 0
  %v1861 = vsel %vm981, %v1674, 0
  %v1864 = vsel %vm981, %v1675, 0
  %v1867 = vsel %vm981, %v1676, 0
  %v1870 = vsel %vm981, %v1677, 0
  %v1873 = vsel %vm981, %v1678, 0
  %v1876 = vsel %vm981, %v1679, 0
  %v1879 = vsel %vm981, %v1680, 0
  %v1882 = vsel %vm981, %v1681, 0
  %v1885 = vsel %vm981, %v1682, 0
  %v1888 = vsel %vm981, %v1683, 0
  %v1891 = vsel %vm981, %v1684, 0
  %v1894 = vsel %vm981, %v1685, 0
  %v1897 = vsel %vm981, %v1686, 0
  %v1900 = vsel %vm981, %v1687, 0
  %v1903 = vsel %vm981, %v1688, 0
  %v1906 = vsel %vm981, %v1689, 0
  %v1909 = vsel %vm981, %v1690, 0
  %v1912 = vsel %vm981, %v1691, 0
  %v1915 = vsel %vm981, %v1692, 0
  %v1918 = vsel %vm981, %v1693, 0
  %v1921 = vsel %vm981, %v1694, 0
  %1923 = vmatpush.bf16.msra.mxu0 0
  %1924 = vmatpush.bf16.msra.mxu0 0
  %1925 = vmatpush.bf16.msra.mxu0 0
  %1926 = vmatpush.bf16.msra.mxu0 0
  %1927 = vmatpush.bf16.msra.mxu0 %v1726
  %1928 = vmatpush.bf16.msra.mxu0 %v1725
  %1929 = vmatpush.bf16.msra.mxu0 %v1724
  %1930 = vmatpush.bf16.msra.mxu0 %v1723
  %1931 = vmatmul.bf16.gmra.mxu0 %v1732
  %v1932 = vpop.f32.mrf.mxu0
  %v1933 = vadd.f32 %v1705, %v1932
  %v1934 = vpop.f32.mrf.mxu0
  %v1935 = vadd.f32 %v1705, %v1934
  %1936 = vmatmul.bf16.gmra.mxu0 %v1735
  %v1937 = vpop.f32.mrf.mxu0
  %v1938 = vadd.f32 %v1705, %v1937
  %v1939 = vpop.f32.mrf.mxu0
  %v1940 = vadd.f32 %v1705, %v1939
  %1941 = vmatmul.bf16.gmra.mxu0 %v1738
  %v1942 = vpop.f32.mrf.mxu0
  %v1943 = vadd.f32 %v1705, %v1942
  %v1944 = vpop.f32.mrf.mxu0
  %v1945 = vadd.f32 %v1705, %v1944
  %1946 = vmatmul.bf16.gmra.mxu0 %v1741
  %v1947 = vpop.f32.mrf.mxu0
  %v1948 = vadd.f32 %v1705, %v1947
  %v1949 = vpop.f32.mrf.mxu0
  %v1950 = vadd.f32 %v1705, %v1949
  %1951 = vmatmul.bf16.gmra.mxu0 %v1744
  %v1952 = vpop.f32.mrf.mxu0
  %v1953 = vadd.f32 %v1705, %v1952
  %v1954 = vpop.f32.mrf.mxu0
  %v1955 = vadd.f32 %v1705, %v1954
  %1956 = vmatmul.bf16.gmra.mxu0 %v1747
  %v1957 = vpop.f32.mrf.mxu0
  %v1958 = vadd.f32 %v1705, %v1957
  %v1959 = vpop.f32.mrf.mxu0
  %v1960 = vadd.f32 %v1705, %v1959
  %1961 = vmatmul.bf16.gmra.mxu0 %v1750
  %v1962 = vpop.f32.mrf.mxu0
  %v1963 = vadd.f32 %v1705, %v1962
  %v1964 = vpop.f32.mrf.mxu0
  %v1965 = vadd.f32 %v1705, %v1964
  %1966 = vmatmul.bf16.gmra.mxu0 %v1753
  %v1967 = vpop.f32.mrf.mxu0
  %v1968 = vadd.f32 %v1705, %v1967
  %v1969 = vpop.f32.mrf.mxu0
  %v1970 = vadd.f32 %v1705, %v1969
  %1971 = vmatmul.bf16.gmra.mxu0 %v1756
  %v1972 = vpop.f32.mrf.mxu0
  %v1973 = vadd.f32 %v1705, %v1972
  %v1974 = vpop.f32.mrf.mxu0
  %v1975 = vadd.f32 %v1705, %v1974
  %1976 = vmatmul.bf16.gmra.mxu0 %v1759
  %v1977 = vpop.f32.mrf.mxu0
  %v1978 = vadd.f32 %v1705, %v1977
  %v1979 = vpop.f32.mrf.mxu0
  %v1980 = vadd.f32 %v1705, %v1979
  %1981 = vmatmul.bf16.gmra.mxu0 %v1762
  %v1982 = vpop.f32.mrf.mxu0
  %v1983 = vadd.f32 %v1705, %v1982
  %v1984 = vpop.f32.mrf.mxu0
  %v1985 = vadd.f32 %v1705, %v1984
  %1986 = vmatmul.bf16.gmra.mxu0 %v1765
  %v1987 = vpop.f32.mrf.mxu0
  %v1988 = vadd.f32 %v1705, %v1987
  %v1989 = vpop.f32.mrf.mxu0
  %v1990 = vadd.f32 %v1705, %v1989
  %1991 = vmatmul.bf16.gmra.mxu0 %v1768
  %v1992 = vpop.f32.mrf.mxu0
  %v1993 = vadd.f32 %v1705, %v1992
  %v1994 = vpop.f32.mrf.mxu0
  %v1995 = vadd.f32 %v1705, %v1994
  %1996 = vmatmul.bf16.gmra.mxu0 %v1771
  %v1997 = vpop.f32.mrf.mxu0
  %v1998 = vadd.f32 %v1705, %v1997
  %v1999 = vpop.f32.mrf.mxu0
  %v2000 = vadd.f32 %v1705, %v1999
  %2001 = vmatmul.bf16.gmra.mxu0 %v1774
  %v2002 = vpop.f32.mrf.mxu0
  %v2003 = vadd.f32 %v1705, %v2002
  %v2004 = vpop.f32.mrf.mxu0
  %v2005 = vadd.f32 %v1705, %v2004
  %2006 = vmatmul.bf16.gmra.mxu0 %v1777
  %v2007 = vpop.f32.mrf.mxu0
  %v2008 = vadd.f32 %v1705, %v2007
  %v2009 = vpop.f32.mrf.mxu0
  %v2010 = vadd.f32 %v1705, %v2009
  %2011 = vmatmul.bf16.gmra.mxu0 %v1780
  %v2012 = vpop.f32.mrf.mxu0
  %v2013 = vadd.f32 %v1705, %v2012
  %v2014 = vpop.f32.mrf.mxu0
  %v2015 = vadd.f32 %v1705, %v2014
  %2016 = vmatmul.bf16.gmra.mxu0 %v1783
  %v2017 = vpop.f32.mrf.mxu0
  %v2018 = vadd.f32 %v1705, %v2017
  %v2019 = vpop.f32.mrf.mxu0
  %v2020 = vadd.f32 %v1705, %v2019
  %2021 = vmatmul.bf16.gmra.mxu0 %v1786
  %v2022 = vpop.f32.mrf.mxu0
  %v2023 = vadd.f32 %v1705, %v2022
  %v2024 = vpop.f32.mrf.mxu0
  %v2025 = vadd.f32 %v1705, %v2024
  %2026 = vmatmul.bf16.gmra.mxu0 %v1789
  %v2027 = vpop.f32.mrf.mxu0
  %v2028 = vadd.f32 %v1705, %v2027
  %v2029 = vpop.f32.mrf.mxu0
  %v2030 = vadd.f32 %v1705, %v2029
  %2031 = vmatmul.bf16.gmra.mxu0 %v1792
  %v2032 = vpop.f32.mrf.mxu0
  %v2033 = vadd.f32 %v1705, %v2032
  %v2034 = vpop.f32.mrf.mxu0
  %v2035 = vadd.f32 %v1705, %v2034
  %2036 = vmatmul.bf16.gmra.mxu0 %v1795
  %v2037 = vpop.f32.mrf.mxu0
  %v2038 = vadd.f32 %v1705, %v2037
  %v2039 = vpop.f32.mrf.mxu0
  %v2040 = vadd.f32 %v1705, %v2039
  %2041 = vmatmul.bf16.gmra.mxu0 %v1798
  %v2042 = vpop.f32.mrf.mxu0
  %v2043 = vadd.f32 %v1705, %v2042
  %v2044 = vpop.f32.mrf.mxu0
  %v2045 = vadd.f32 %v1705, %v2044
  %2046 = vmatmul.bf16.gmra.mxu0 %v1801
  %v2047 = vpop.f32.mrf.mxu0
  %v2048 = vadd.f32 %v1705, %v2047
  %v2049 = vpop.f32.mrf.mxu0
  %v2050 = vadd.f32 %v1705, %v2049
  %2051 = vmatmul.bf16.gmra.mxu0 %v1804
  %v2052 = vpop.f32.mrf.mxu0
  %v2053 = vadd.f32 %v1705, %v2052
  %v2054 = vpop.f32.mrf.mxu0
  %v2055 = vadd.f32 %v1705, %v2054
  %2056 = vmatmul.bf16.gmra.mxu0 %v1807
  %v2057 = vpop.f32.mrf.mxu0
  %v2058 = vadd.f32 %v1705, %v2057
  %v2059 = vpop.f32.mrf.mxu0
  %v2060 = vadd.f32 %v1705, %v2059
  %2061 = vmatmul.bf16.gmra.mxu0 %v1810
  %v2062 = vpop.f32.mrf.mxu0
  %v2063 = vadd.f32 %v1705, %v2062
  %v2064 = vpop.f32.mrf.mxu0
  %v2065 = vadd.f32 %v1705, %v2064
  %2066 = vmatmul.bf16.gmra.mxu0 %v1813
  %v2067 = vpop.f32.mrf.mxu0
  %v2068 = vadd.f32 %v1705, %v2067
  %v2069 = vpop.f32.mrf.mxu0
  %v2070 = vadd.f32 %v1705, %v2069
  %2071 = vmatmul.bf16.gmra.mxu0 %v1816
  %v2072 = vpop.f32.mrf.mxu0
  %v2073 = vadd.f32 %v1705, %v2072
  %v2074 = vpop.f32.mrf.mxu0
  %v2075 = vadd.f32 %v1705, %v2074
  %2076 = vmatmul.bf16.gmra.mxu0 %v1819
  %v2077 = vpop.f32.mrf.mxu0
  %v2078 = vadd.f32 %v1705, %v2077
  %v2079 = vpop.f32.mrf.mxu0
  %v2080 = vadd.f32 %v1705, %v2079
  %2081 = vmatmul.bf16.gmra.mxu0 %v1822
  %v2082 = vpop.f32.mrf.mxu0
  %v2083 = vadd.f32 %v1705, %v2082
  %v2084 = vpop.f32.mrf.mxu0
  %v2085 = vadd.f32 %v1705, %v2084
  %2086 = vmatmul.bf16.gmra.mxu0 %v1825
  %v2087 = vpop.f32.mrf.mxu0
  %v2088 = vadd.f32 %v1705, %v2087
  %v2089 = vpop.f32.mrf.mxu0
  %v2090 = vadd.f32 %v1705, %v2089
  %2091 = vmatmul.bf16.gmra.mxu0 %v1828
  %v2092 = vpop.f32.mrf.mxu0
  %v2093 = vadd.f32 %v1705, %v2092
  %v2094 = vpop.f32.mrf.mxu0
  %v2095 = vadd.f32 %v1705, %v2094
  %2096 = vmatmul.bf16.gmra.mxu0 %v1831
  %v2097 = vpop.f32.mrf.mxu0
  %v2098 = vadd.f32 %v1705, %v2097
  %v2099 = vpop.f32.mrf.mxu0
  %v2100 = vadd.f32 %v1705, %v2099
  %2101 = vmatmul.bf16.gmra.mxu0 %v1834
  %v2102 = vpop.f32.mrf.mxu0
  %v2103 = vadd.f32 %v1705, %v2102
  %v2104 = vpop.f32.mrf.mxu0
  %v2105 = vadd.f32 %v1705, %v2104
  %2106 = vmatmul.bf16.gmra.mxu0 %v1837
  %v2107 = vpop.f32.mrf.mxu0
  %v2108 = vadd.f32 %v1705, %v2107
  %v2109 = vpop.f32.mrf.mxu0
  %v2110 = vadd.f32 %v1705, %v2109
  %2111 = vmatmul.bf16.gmra.mxu0 %v1840
  %v2112 = vpop.f32.mrf.mxu0
  %v2113 = vadd.f32 %v1705, %v2112
  %v2114 = vpop.f32.mrf.mxu0
  %v2115 = vadd.f32 %v1705, %v2114
  %2116 = vmatmul.bf16.gmra.mxu0 %v1843
  %v2117 = vpop.f32.mrf.mxu0
  %v2118 = vadd.f32 %v1705, %v2117
  %v2119 = vpop.f32.mrf.mxu0
  %v2120 = vadd.f32 %v1705, %v2119
  %2121 = vmatmul.bf16.gmra.mxu0 %v1846
  %v2122 = vpop.f32.mrf.mxu0
  %v2123 = vadd.f32 %v1705, %v2122
  %v2124 = vpop.f32.mrf.mxu0
  %v2125 = vadd.f32 %v1705, %v2124
  %2126 = vmatmul.bf16.gmra.mxu0 %v1849
  %v2127 = vpop.f32.mrf.mxu0
  %v2128 = vadd.f32 %v1705, %v2127
  %v2129 = vpop.f32.mrf.mxu0
  %v2130 = vadd.f32 %v1705, %v2129
  %2131 = vmatmul.bf16.gmra.mxu0 %v1852
  %v2132 = vpop.f32.mrf.mxu0
  %v2133 = vadd.f32 %v1705, %v2132
  %v2134 = vpop.f32.mrf.mxu0
  %v2135 = vadd.f32 %v1705, %v2134
  %2136 = vmatmul.bf16.gmra.mxu0 %v1855
  %v2137 = vpop.f32.mrf.mxu0
  %v2138 = vadd.f32 %v1705, %v2137
  %v2139 = vpop.f32.mrf.mxu0
  %v2140 = vadd.f32 %v1705, %v2139
  %2141 = vmatmul.bf16.gmra.mxu0 %v1858
  %v2142 = vpop.f32.mrf.mxu0
  %v2143 = vadd.f32 %v1705, %v2142
  %v2144 = vpop.f32.mrf.mxu0
  %v2145 = vadd.f32 %v1705, %v2144
  %2146 = vmatmul.bf16.gmra.mxu0 %v1861
  %v2147 = vpop.f32.mrf.mxu0
  %v2148 = vadd.f32 %v1705, %v2147
  %v2149 = vpop.f32.mrf.mxu0
  %v2150 = vadd.f32 %v1705, %v2149
  %2151 = vmatmul.bf16.gmra.mxu0 %v1864
  %v2152 = vpop.f32.mrf.mxu0
  %v2153 = vadd.f32 %v1705, %v2152
  %v2154 = vpop.f32.mrf.mxu0
  %v2155 = vadd.f32 %v1705, %v2154
  %2156 = vmatmul.bf16.gmra.mxu0 %v1867
  %v2157 = vpop.f32.mrf.mxu0
  %v2158 = vadd.f32 %v1705, %v2157
  %v2159 = vpop.f32.mrf.mxu0
  %v2160 = vadd.f32 %v1705, %v2159
  %2161 = vmatmul.bf16.gmra.mxu0 %v1870
  %v2162 = vpop.f32.mrf.mxu0
  %v2163 = vadd.f32 %v1705, %v2162
  %v2164 = vpop.f32.mrf.mxu0
  %v2165 = vadd.f32 %v1705, %v2164
  %2166 = vmatmul.bf16.gmra.mxu0 %v1873
  %v2167 = vpop.f32.mrf.mxu0
  %v2168 = vadd.f32 %v1705, %v2167
  %v2169 = vpop.f32.mrf.mxu0
  %v2170 = vadd.f32 %v1705, %v2169
  %2171 = vmatmul.bf16.gmra.mxu0 %v1876
  %v2172 = vpop.f32.mrf.mxu0
  %v2173 = vadd.f32 %v1705, %v2172
  %v2174 = vpop.f32.mrf.mxu0
  %v2175 = vadd.f32 %v1705, %v2174
  %2176 = vmatmul.bf16.gmra.mxu0 %v1879
  %v2177 = vpop.f32.mrf.mxu0
  %v2178 = vadd.f32 %v1705, %v2177
  %v2179 = vpop.f32.mrf.mxu0
  %v2180 = vadd.f32 %v1705, %v2179
  %2181 = vmatmul.bf16.gmra.mxu0 %v1882
  %v2182 = vpop.f32.mrf.mxu0
  %v2183 = vadd.f32 %v1705, %v2182
  %v2184 = vpop.f32.mrf.mxu0
  %v2185 = vadd.f32 %v1705, %v2184
  %2186 = vmatmul.bf16.gmra.mxu0 %v1885
  %v2187 = vpop.f32.mrf.mxu0
  %v2188 = vadd.f32 %v1705, %v2187
  %v2189 = vpop.f32.mrf.mxu0
  %v2190 = vadd.f32 %v1705, %v2189
  %2191 = vmatmul.bf16.gmra.mxu0 %v1888
  %v2192 = vpop.f32.mrf.mxu0
  %v2193 = vadd.f32 %v1705, %v2192
  %v2194 = vpop.f32.mrf.mxu0
  %v2195 = vadd.f32 %v1705, %v2194
  %2196 = vmatmul.bf16.gmra.mxu0 %v1891
  %v2197 = vpop.f32.mrf.mxu0
  %v2198 = vadd.f32 %v1705, %v2197
  %v2199 = vpop.f32.mrf.mxu0
  %v2200 = vadd.f32 %v1705, %v2199
  %2201 = vmatmul.bf16.gmra.mxu0 %v1894
  %v2202 = vpop.f32.mrf.mxu0
  %v2203 = vadd.f32 %v1705, %v2202
  %v2204 = vpop.f32.mrf.mxu0
  %v2205 = vadd.f32 %v1705, %v2204
  %2206 = vmatmul.bf16.gmra.mxu0 %v1897
  %v2207 = vpop.f32.mrf.mxu0
  %v2208 = vadd.f32 %v1705, %v2207
  %v2209 = vpop.f32.mrf.mxu0
  %v2210 = vadd.f32 %v1705, %v2209
  %2211 = vmatmul.bf16.gmra.mxu0 %v1900
  %v2212 = vpop.f32.mrf.mxu0
  %v2213 = vadd.f32 %v1705, %v2212
  %v2214 = vpop.f32.mrf.mxu0
  %v2215 = vadd.f32 %v1705, %v2214
  %2216 = vmatmul.bf16.gmra.mxu0 %v1903
  %v2217 = vpop.f32.mrf.mxu0
  %v2218 = vadd.f32 %v1705, %v2217
  %v2219 = vpop.f32.mrf.mxu0
  %v2220 = vadd.f32 %v1705, %v2219
  %2221 = vmatmul.bf16.gmra.mxu0 %v1906
  %v2222 = vpop.f32.mrf.mxu0
  %v2223 = vadd.f32 %v1705, %v2222
  %v2224 = vpop.f32.mrf.mxu0
  %v2225 = vadd.f32 %v1705, %v2224
  %2226 = vmatmul.bf16.gmra.mxu0 %v1909
  %v2227 = vpop.f32.mrf.mxu0
  %v2228 = vadd.f32 %v1705, %v2227
  %v2229 = vpop.f32.mrf.mxu0
  %v2230 = vadd.f32 %v1705, %v2229
  %2231 = vmatmul.bf16.gmra.mxu0 %v1912
  %v2232 = vpop.f32.mrf.mxu0
  %v2233 = vadd.f32 %v1705, %v2232
  %v2234 = vpop.f32.mrf.mxu0
  %v2235 = vadd.f32 %v1705, %v2234
  %2236 = vmatmul.bf16.gmra.mxu0 %v1915
  %v2237 = vpop.f32.mrf.mxu0
  %v2238 = vadd.f32 %v1705, %v2237
  %v2239 = vpop.f32.mrf.mxu0
  %v2240 = vadd.f32 %v1705, %v2239
  %2241 = vmatmul.bf16.gmra.mxu0 %v1918
  %v2242 = vpop.f32.mrf.mxu0
  %v2243 = vadd.f32 %v1705, %v2242
  %v2244 = vpop.f32.mrf.mxu0
  %v2245 = vadd.f32 %v1705, %v2244
  %2246 = vmatmul.bf16.gmra.mxu0 %v1921
  %v2247 = vpop.f32.mrf.mxu0
  %v2248 = vadd.f32 %v1705, %v2247
  %v2249 = vpop.f32.mrf.mxu0
  %v2250 = vadd.f32 %v1705, %v2249
  %2251 = vdwg.mxu0
  %v2252 = vmul.f32 %v1933, %v1933
  %v2253 = vmul.f32 %v1935, %v1935
  %v2254 = vmul.f32 %v1938, %v1938
  %v2255 = vmul.f32 %v1940, %v1940
  %v2256 = vmul.f32 %v1943, %v1943
  %v2257 = vmul.f32 %v1945, %v1945
  %v2258 = vmul.f32 %v1948, %v1948
  %v2259 = vmul.f32 %v1950, %v1950
  %v2260 = vmul.f32 %v1953, %v1953
  %v2261 = vmul.f32 %v1955, %v1955
  %v2262 = vmul.f32 %v1958, %v1958
  %v2263 = vmul.f32 %v1960, %v1960
  %v2264 = vmul.f32 %v1963, %v1963
  %v2265 = vmul.f32 %v1965, %v1965
  %v2266 = vmul.f32 %v1968, %v1968
  %v2267 = vmul.f32 %v1970, %v1970
  %v2268 = vmul.f32 %v1973, %v1973
  %v2269 = vmul.f32 %v1975, %v1975
  %v2270 = vmul.f32 %v1978, %v1978
  %v2271 = vmul.f32 %v1980, %v1980
  %v2272 = vmul.f32 %v1983, %v1983
  %v2273 = vmul.f32 %v1985, %v1985
  %v2274 = vmul.f32 %v1988, %v1988
  %v2275 = vmul.f32 %v1990, %v1990
  %v2276 = vmul.f32 %v1993, %v1993
  %v2277 = vmul.f32 %v1995, %v1995
  %v2278 = vmul.f32 %v1998, %v1998
  %v2279 = vmul.f32 %v2000, %v2000
  %v2280 = vmul.f32 %v2003, %v2003
  %v2281 = vmul.f32 %v2005, %v2005
  %v2282 = vmul.f32 %v2008, %v2008
  %v2283 = vmul.f32 %v2010, %v2010
  %v2284 = vmul.f32 %v2013, %v2013
  %v2285 = vmul.f32 %v2015, %v2015
  %v2286 = vmul.f32 %v2018, %v2018
  %v2287 = vmul.f32 %v2020, %v2020
  %v2288 = vmul.f32 %v2023, %v2023
  %v2289 = vmul.f32 %v2025, %v2025
  %v2290 = vmul.f32 %v2028, %v2028
  %v2291 = vmul.f32 %v2030, %v2030
  %v2292 = vmul.f32 %v2033, %v2033
  %v2293 = vmul.f32 %v2035, %v2035
  %v2294 = vmul.f32 %v2038, %v2038
  %v2295 = vmul.f32 %v2040, %v2040
  %v2296 = vmul.f32 %v2043, %v2043
  %v2297 = vmul.f32 %v2045, %v2045
  %v2298 = vmul.f32 %v2048, %v2048
  %v2299 = vmul.f32 %v2050, %v2050
  %v2300 = vmul.f32 %v2053, %v2053
  %v2301 = vmul.f32 %v2055, %v2055
  %v2302 = vmul.f32 %v2058, %v2058
  %v2303 = vmul.f32 %v2060, %v2060
  %v2304 = vmul.f32 %v2063, %v2063
  %v2305 = vmul.f32 %v2065, %v2065
  %v2306 = vmul.f32 %v2068, %v2068
  %v2307 = vmul.f32 %v2070, %v2070
  %v2308 = vmul.f32 %v2073, %v2073
  %v2309 = vmul.f32 %v2075, %v2075
  %v2310 = vmul.f32 %v2078, %v2078
  %v2311 = vmul.f32 %v2080, %v2080
  %v2312 = vmul.f32 %v2083, %v2083
  %v2313 = vmul.f32 %v2085, %v2085
  %v2314 = vmul.f32 %v2088, %v2088
  %v2315 = vmul.f32 %v2090, %v2090
  %v2316 = vmul.f32 %v2093, %v2093
  %v2317 = vmul.f32 %v2095, %v2095
  %v2318 = vmul.f32 %v2098, %v2098
  %v2319 = vmul.f32 %v2100, %v2100
  %v2320 = vmul.f32 %v2103, %v2103
  %v2321 = vmul.f32 %v2105, %v2105
  %v2322 = vmul.f32 %v2108, %v2108
  %v2323 = vmul.f32 %v2110, %v2110
  %v2324 = vmul.f32 %v2113, %v2113
  %v2325 = vmul.f32 %v2115, %v2115
  %v2326 = vmul.f32 %v2118, %v2118
  %v2327 = vmul.f32 %v2120, %v2120
  %v2328 = vmul.f32 %v2123, %v2123
  %v2329 = vmul.f32 %v2125, %v2125
  %v2330 = vmul.f32 %v2128, %v2128
  %v2331 = vmul.f32 %v2130, %v2130
  %v2332 = vmul.f32 %v2133, %v2133
  %v2333 = vmul.f32 %v2135, %v2135
  %v2334 = vmul.f32 %v2138, %v2138
  %v2335 = vmul.f32 %v2140, %v2140
  %v2336 = vmul.f32 %v2143, %v2143
  %v2337 = vmul.f32 %v2145, %v2145
  %v2338 = vmul.f32 %v2148, %v2148
  %v2339 = vmul.f32 %v2150, %v2150
  %v2340 = vmul.f32 %v2153, %v2153
  %v2341 = vmul.f32 %v2155, %v2155
  %v2342 = vmul.f32 %v2158, %v2158
  %v2343 = vmul.f32 %v2160, %v2160
  %v2344 = vmul.f32 %v2163, %v2163
  %v2345 = vmul.f32 %v2165, %v2165
  %v2346 = vmul.f32 %v2168, %v2168
  %v2347 = vmul.f32 %v2170, %v2170
  %v2348 = vmul.f32 %v2173, %v2173
  %v2349 = vmul.f32 %v2175, %v2175
  %v2350 = vmul.f32 %v2178, %v2178
  %v2351 = vmul.f32 %v2180, %v2180
  %v2352 = vmul.f32 %v2183, %v2183
  %v2353 = vmul.f32 %v2185, %v2185
  %v2354 = vmul.f32 %v2188, %v2188
  %v2355 = vmul.f32 %v2190, %v2190
  %v2356 = vmul.f32 %v2193, %v2193
  %v2357 = vmul.f32 %v2195, %v2195
  %v2358 = vmul.f32 %v2198, %v2198
  %v2359 = vmul.f32 %v2200, %v2200
  %v2360 = vmul.f32 %v2203, %v2203
  %v2361 = vmul.f32 %v2205, %v2205
  %v2362 = vmul.f32 %v2208, %v2208
  %v2363 = vmul.f32 %v2210, %v2210
  %v2364 = vmul.f32 %v2213, %v2213
  %v2365 = vmul.f32 %v2215, %v2215
  %v2366 = vmul.f32 %v2218, %v2218
  %v2367 = vmul.f32 %v2220, %v2220
  %v2368 = vmul.f32 %v2223, %v2223
  %v2369 = vmul.f32 %v2225, %v2225
  %v2370 = vmul.f32 %v2228, %v2228
  %v2371 = vmul.f32 %v2230, %v2230
  %v2372 = vmul.f32 %v2233, %v2233
  %v2373 = vmul.f32 %v2235, %v2235
  %v2374 = vmul.f32 %v2238, %v2238
  %v2375 = vmul.f32 %v2240, %v2240
  %v2376 = vmul.f32 %v2243, %v2243
  %v2377 = vmul.f32 %v2245, %v2245
  %v2378 = vmul.f32 %v2248, %v2248
  %v2379 = vmul.f32 %v2250, %v2250
  %vm2380 = vcmask 64512
  %v2382 = vsel %vm2380, 1.0, 0
  %v2385 = vsel %vm2380, %v2252, 0
  %v2388 = vsel %vm2380, %v2253, 0
  %v2391 = vsel %vm2380, %v2254, 0
  %v2394 = vsel %vm2380, %v2255, 0
  %v2397 = vsel %vm2380, %v2256, 0
  %v2400 = vsel %vm2380, %v2257, 0
  %v2403 = vsel %vm2380, %v2258, 0
  %v2406 = vsel %vm2380, %v2259, 0
  %v2409 = vsel %vm2380, %v2260, 0
  %v2412 = vsel %vm2380, %v2261, 0
  %v2415 = vsel %vm2380, %v2262, 0
  %v2418 = vsel %vm2380, %v2263, 0
  %v2421 = vsel %vm2380, %v2264, 0
  %v2424 = vsel %vm2380, %v2265, 0
  %v2427 = vsel %vm2380, %v2266, 0
  %v2430 = vsel %vm2380, %v2267, 0
  %v2433 = vsel %vm2380, %v2268, 0
  %v2436 = vsel %vm2380, %v2269, 0
  %v2439 = vsel %vm2380, %v2270, 0
  %v2442 = vsel %vm2380, %v2271, 0
  %v2445 = vsel %vm2380, %v2272, 0
  %v2448 = vsel %vm2380, %v2273, 0
  %v2451 = vsel %vm2380, %v2274, 0
  %v2454 = vsel %vm2380, %v2275, 0
  %v2457 = vsel %vm2380, %v2276, 0
  %v2460 = vsel %vm2380, %v2277, 0
  %v2463 = vsel %vm2380, %v2278, 0
  %v2466 = vsel %vm2380, %v2279, 0
  %v2469 = vsel %vm2380, %v2280, 0
  %v2472 = vsel %vm2380, %v2281, 0
  %v2475 = vsel %vm2380, %v2282, 0
  %v2478 = vsel %vm2380, %v2283, 0
  %v2481 = vsel %vm2380, %v2284, 0
  %v2484 = vsel %vm2380, %v2285, 0
  %v2487 = vsel %vm2380, %v2286, 0
  %v2490 = vsel %vm2380, %v2287, 0
  %v2493 = vsel %vm2380, %v2288, 0
  %v2496 = vsel %vm2380, %v2289, 0
  %v2499 = vsel %vm2380, %v2290, 0
  %v2502 = vsel %vm2380, %v2291, 0
  %v2505 = vsel %vm2380, %v2292, 0
  %v2508 = vsel %vm2380, %v2293, 0
  %v2511 = vsel %vm2380, %v2294, 0
  %v2514 = vsel %vm2380, %v2295, 0
  %v2517 = vsel %vm2380, %v2296, 0
  %v2520 = vsel %vm2380, %v2297, 0
  %v2523 = vsel %vm2380, %v2298, 0
  %v2526 = vsel %vm2380, %v2299, 0
  %v2529 = vsel %vm2380, %v2300, 0
  %v2532 = vsel %vm2380, %v2301, 0
  %v2535 = vsel %vm2380, %v2302, 0
  %v2538 = vsel %vm2380, %v2303, 0
  %v2541 = vsel %vm2380, %v2304, 0
  %v2544 = vsel %vm2380, %v2305, 0
  %v2547 = vsel %vm2380, %v2306, 0
  %v2550 = vsel %vm2380, %v2307, 0
  %v2553 = vsel %vm2380, %v2308, 0
  %v2556 = vsel %vm2380, %v2309, 0
  %v2559 = vsel %vm2380, %v2310, 0
  %v2562 = vsel %vm2380, %v2311, 0
  %v2565 = vsel %vm2380, %v2312, 0
  %v2568 = vsel %vm2380, %v2313, 0
  %v2571 = vsel %vm2380, %v2314, 0
  %v2574 = vsel %vm2380, %v2315, 0
  %v2577 = vsel %vm2380, %v2316, 0
  %v2580 = vsel %vm2380, %v2317, 0
  %v2583 = vsel %vm2380, %v2318, 0
  %v2586 = vsel %vm2380, %v2319, 0
  %v2589 = vsel %vm2380, %v2320, 0
  %v2592 = vsel %vm2380, %v2321, 0
  %v2595 = vsel %vm2380, %v2322, 0
  %v2598 = vsel %vm2380, %v2323, 0
  %v2601 = vsel %vm2380, %v2324, 0
  %v2604 = vsel %vm2380, %v2325, 0
  %v2607 = vsel %vm2380, %v2326, 0
  %v2610 = vsel %vm2380, %v2327, 0
  %v2613 = vsel %vm2380, %v2328, 0
  %v2616 = vsel %vm2380, %v2329, 0
  %v2619 = vsel %vm2380, %v2330, 0
  %v2622 = vsel %vm2380, %v2331, 0
  %v2625 = vsel %vm2380, %v2332, 0
  %v2628 = vsel %vm2380, %v2333, 0
  %v2631 = vsel %vm2380, %v2334, 0
  %v2634 = vsel %vm2380, %v2335, 0
  %v2637 = vsel %vm2380, %v2336, 0
  %v2640 = vsel %vm2380, %v2337, 0
  %v2643 = vsel %vm2380, %v2338, 0
  %v2646 = vsel %vm2380, %v2339, 0
  %v2649 = vsel %vm2380, %v2340, 0
  %v2652 = vsel %vm2380, %v2341, 0
  %v2655 = vsel %vm2380, %v2342, 0
  %v2658 = vsel %vm2380, %v2343, 0
  %v2661 = vsel %vm2380, %v2344, 0
  %v2664 = vsel %vm2380, %v2345, 0
  %v2667 = vsel %vm2380, %v2346, 0
  %v2670 = vsel %vm2380, %v2347, 0
  %v2673 = vsel %vm2380, %v2348, 0
  %v2676 = vsel %vm2380, %v2349, 0
  %v2679 = vsel %vm2380, %v2350, 0
  %v2682 = vsel %vm2380, %v2351, 0
  %v2685 = vsel %vm2380, %v2352, 0
  %v2688 = vsel %vm2380, %v2353, 0
  %v2691 = vsel %vm2380, %v2354, 0
  %v2694 = vsel %vm2380, %v2355, 0
  %v2697 = vsel %vm2380, %v2356, 0
  %v2700 = vsel %vm2380, %v2357, 0
  %v2703 = vsel %vm2380, %v2358, 0
  %v2706 = vsel %vm2380, %v2359, 0
  %v2709 = vsel %vm2380, %v2360, 0
  %v2712 = vsel %vm2380, %v2361, 0
  %v2715 = vsel %vm2380, %v2362, 0
  %v2718 = vsel %vm2380, %v2363, 0
  %v2721 = vsel %vm2380, %v2364, 0
  %v2724 = vsel %vm2380, %v2365, 0
  %v2727 = vsel %vm2380, %v2366, 0
  %v2730 = vsel %vm2380, %v2367, 0
  %v2733 = vsel %vm2380, %v2368, 0
  %v2736 = vsel %vm2380, %v2369, 0
  %v2739 = vsel %vm2380, %v2370, 0
  %v2742 = vsel %vm2380, %v2371, 0
  %v2745 = vsel %vm2380, %v2372, 0
  %v2748 = vsel %vm2380, %v2373, 0
  %v2751 = vsel %vm2380, %v2374, 0
  %v2754 = vsel %vm2380, %v2375, 0
  %v2757 = vsel %vm2380, %v2376, 0
  %v2760 = vsel %vm2380, %v2377, 0
  %v2763 = vsel %vm2380, %v2378, 0
  %v2766 = vsel %vm2380, %v2379, 0
  %2768 = vmatpush.xpose.msra.mxu0 %v2430
  %2769 = vmatpush.xpose.msra.mxu0 %v2427
  %2770 = vmatpush.xpose.msra.mxu0 %v2424
  %2771 = vmatpush.xpose.msra.mxu0 %v2421
  %2772 = vmatpush.xpose.msra.mxu0 %v2418
  %2773 = vmatpush.xpose.msra.mxu0 %v2415
  %2774 = vmatpush.xpose.msra.mxu0 %v2412
  %2775 = vmatpush.xpose.msra.mxu0 %v2409
  %2776 = vmatpush.xpose.msra.mxu0 %v2406
  %2777 = vmatpush.xpose.msra.mxu0 %v2403
  %2778 = vmatpush.xpose.msra.mxu0 %v2400
  %2779 = vmatpush.xpose.msra.mxu0 %v2397
  %2780 = vmatpush.xpose.msra.mxu0 %v2394
  %2781 = vmatpush.xpose.msra.mxu0 %v2391
  %2782 = vmatpush.xpose.msra.mxu0 %v2388
  %2783 = vmatpush.xpose.msra.mxu0 %v2385
  %2784 = vmatmul.f32.gmra.mxu0 %v2382
  %v2785 = vpop.f32.mrf.mxu0
  %v2786 = vadd.f32 0.0, %v2785
  %2787 = vdwg.mxu0
  %2788 = vmatpush.xpose.msra.mxu0 %v2478
  %2789 = vmatpush.xpose.msra.mxu0 %v2475
  %2790 = vmatpush.xpose.msra.mxu0 %v2472
  %2791 = vmatpush.xpose.msra.mxu0 %v2469
  %2792 = vmatpush.xpose.msra.mxu0 %v2466
  %2793 = vmatpush.xpose.msra.mxu0 %v2463
  %2794 = vmatpush.xpose.msra.mxu0 %v2460
  %2795 = vmatpush.xpose.msra.mxu0 %v2457
  %2796 = vmatpush.xpose.msra.mxu0 %v2454
  %2797 = vmatpush.xpose.msra.mxu0 %v2451
  %2798 = vmatpush.xpose.msra.mxu0 %v2448
  %2799 = vmatpush.xpose.msra.mxu0 %v2445
  %2800 = vmatpush.xpose.msra.mxu0 %v2442
  %2801 = vmatpush.xpose.msra.mxu0 %v2439
  %2802 = vmatpush.xpose.msra.mxu0 %v2436
  %2803 = vmatpush.xpose.msra.mxu0 %v2433
  %2804 = vmatmul.f32.gmra.mxu0 %v2382
  %v2805 = vpop.f32.mrf.mxu0
  %v2806 = vadd.f32 0.0, %v2805
  %2807 = vdwg.mxu0
  %2808 = vmatpush.xpose.msra.mxu0 %v2526
  %2809 = vmatpush.xpose.msra.mxu0 %v2523
  %2810 = vmatpush.xpose.msra.mxu0 %v2520
  %2811 = vmatpush.xpose.msra.mxu0 %v2517
  %2812 = vmatpush.xpose.msra.mxu0 %v2514
  %2813 = vmatpush.xpose.msra.mxu0 %v2511
  %2814 = vmatpush.xpose.msra.mxu0 %v2508
  %2815 = vmatpush.xpose.msra.mxu0 %v2505
  %2816 = vmatpush.xpose.msra.mxu0 %v2502
  %2817 = vmatpush.xpose.msra.mxu0 %v2499
  %2818 = vmatpush.xpose.msra.mxu0 %v2496
  %2819 = vmatpush.xpose.msra.mxu0 %v2493
  %2820 = vmatpush.xpose.msra.mxu0 %v2490
  %2821 = vmatpush.xpose.msra.mxu0 %v2487
  %2822 = vmatpush.xpose.msra.mxu0 %v2484
  %2823 = vmatpush.xpose.msra.mxu0 %v2481
  %2824 = vmatmul.f32.gmra.mxu0 %v2382
  %v2825 = vpop.f32.mrf.mxu0
  %v2826 = vadd.f32 0.0, %v2825
  %2827 = vdwg.mxu0
  %2828 = vmatpush.xpose.msra.mxu0 %v2574
  %2829 = vmatpush.xpose.msra.mxu0 %v2571
  %2830 = vmatpush.xpose.msra.mxu0 %v2568
  %2831 = vmatpush.xpose.msra.mxu0 %v2565
  %2832 = vmatpush.xpose.msra.mxu0 %v2562
  %2833 = vmatpush.xpose.msra.mxu0 %v2559
  %2834 = vmatpush.xpose.msra.mxu0 %v2556
  %2835 = vmatpush.xpose.msra.mxu0 %v2553
  %2836 = vmatpush.xpose.msra.mxu0 %v2550
  %2837 = vmatpush.xpose.msra.mxu0 %v2547
  %2838 = vmatpush.xpose.msra.mxu0 %v2544
  %2839 = vmatpush.xpose.msra.mxu0 %v2541
  %2840 = vmatpush.xpose.msra.mxu0 %v2538
  %2841 = vmatpush.xpose.msra.mxu0 %v2535
  %2842 = vmatpush.xpose.msra.mxu0 %v2532
  %2843 = vmatpush.xpose.msra.mxu0 %v2529
  %2844 = vmatmul.f32.gmra.mxu0 %v2382
  %v2845 = vpop.f32.mrf.mxu0
  %v2846 = vadd.f32 0.0, %v2845
  %2847 = vdwg.mxu0
  %2848 = vmatpush.xpose.msra.mxu0 %v2622
  %2849 = vmatpush.xpose.msra.mxu0 %v2619
  %2850 = vmatpush.xpose.msra.mxu0 %v2616
  %2851 = vmatpush.xpose.msra.mxu0 %v2613
  %2852 = vmatpush.xpose.msra.mxu0 %v2610
  %2853 = vmatpush.xpose.msra.mxu0 %v2607
  %2854 = vmatpush.xpose.msra.mxu0 %v2604
  %2855 = vmatpush.xpose.msra.mxu0 %v2601
  %2856 = vmatpush.xpose.msra.mxu0 %v2598
  %2857 = vmatpush.xpose.msra.mxu0 %v2595
  %2858 = vmatpush.xpose.msra.mxu0 %v2592
  %2859 = vmatpush.xpose.msra.mxu0 %v2589
  %2860 = vmatpush.xpose.msra.mxu0 %v2586
  %2861 = vmatpush.xpose.msra.mxu0 %v2583
  %2862 = vmatpush.xpose.msra.mxu0 %v2580
  %2863 = vmatpush.xpose.msra.mxu0 %v2577
  %2864 = vmatmul.f32.gmra.mxu0 %v2382
  %v2865 = vpop.f32.mrf.mxu0
  %v2866 = vadd.f32 0.0, %v2865
  %2867 = vdwg.mxu0
  %2868 = vmatpush.xpose.msra.mxu0 %v2670
  %2869 = vmatpush.xpose.msra.mxu0 %v2667
  %2870 = vmatpush.xpose.msra.mxu0 %v2664
  %2871 = vmatpush.xpose.msra.mxu0 %v2661
  %2872 = vmatpush.xpose.msra.mxu0 %v2658
  %2873 = vmatpush.xpose.msra.mxu0 %v2655
  %2874 = vmatpush.xpose.msra.mxu0 %v2652
  %2875 = vmatpush.xpose.msra.mxu0 %v2649
  %2876 = vmatpush.xpose.msra.mxu0 %v2646
  %2877 = vmatpush.xpose.msra.mxu0 %v2643
  %2878 = vmatpush.xpose.msra.mxu0 %v2640
  %2879 = vmatpush.xpose.msra.mxu0 %v2637
  %2880 = vmatpush.xpose.msra.mxu0 %v2634
  %2881 = vmatpush.xpose.msra.mxu0 %v2631
  %2882 = vmatpush.xpose.msra.mxu0 %v2628
  %2883 = vmatpush.xpose.msra.mxu0 %v2625
  %2884 = vmatmul.f32.gmra.mxu0 %v2382
  %v2885 = vpop.f32.mrf.mxu0
  %v2886 = vadd.f32 0.0, %v2885
  %2887 = vdwg.mxu0
  %2888 = vmatpush.xpose.msra.mxu0 %v2718
  %2889 = vmatpush.xpose.msra.mxu0 %v2715
  %2890 = vmatpush.xpose.msra.mxu0 %v2712
  %2891 = vmatpush.xpose.msra.mxu0 %v2709
  %2892 = vmatpush.xpose.msra.mxu0 %v2706
  %2893 = vmatpush.xpose.msra.mxu0 %v2703
  %2894 = vmatpush.xpose.msra.mxu0 %v2700
  %2895 = vmatpush.xpose.msra.mxu0 %v2697
  %2896 = vmatpush.xpose.msra.mxu0 %v2694
  %2897 = vmatpush.xpose.msra.mxu0 %v2691
  %2898 = vmatpush.xpose.msra.mxu0 %v2688
  %2899 = vmatpush.xpose.msra.mxu0 %v2685
  %2900 = vmatpush.xpose.msra.mxu0 %v2682
  %2901 = vmatpush.xpose.msra.mxu0 %v2679
  %2902 = vmatpush.xpose.msra.mxu0 %v2676
  %2903 = vmatpush.xpose.msra.mxu0 %v2673
  %2904 = vmatmul.f32.gmra.mxu0 %v2382
  %v2905 = vpop.f32.mrf.mxu0
  %v2906 = vadd.f32 0.0, %v2905
  %2907 = vdwg.mxu0
  %2908 = vmatpush.xpose.msra.mxu0 %v2766
  %2909 = vmatpush.xpose.msra.mxu0 %v2763
  %2910 = vmatpush.xpose.msra.mxu0 %v2760
  %2911 = vmatpush.xpose.msra.mxu0 %v2757
  %2912 = vmatpush.xpose.msra.mxu0 %v2754
  %2913 = vmatpush.xpose.msra.mxu0 %v2751
  %2914 = vmatpush.xpose.msra.mxu0 %v2748
  %2915 = vmatpush.xpose.msra.mxu0 %v2745
  %2916 = vmatpush.xpose.msra.mxu0 %v2742
  %2917 = vmatpush.xpose.msra.mxu0 %v2739
  %2918 = vmatpush.xpose.msra.mxu0 %v2736
  %2919 = vmatpush.xpose.msra.mxu0 %v2733
  %2920 = vmatpush.xpose.msra.mxu0 %v2730
  %2921 = vmatpush.xpose.msra.mxu0 %v2727
  %2922 = vmatpush.xpose.msra.mxu0 %v2724
  %2923 = vmatpush.xpose.msra.mxu0 %v2721
  %2924 = vmatmul.f32.gmra.mxu0 %v2382
  %v2925 = vpop.f32.mrf.mxu0
  %v2926 = vadd.f32 0.0, %v2925
  %2927 = vdwg.mxu0
  %v2928 = vrsqrt.pop %v2786
  %v2929 = vmul.f32 %v2928, %v2786
  %v2930 = vmul.f32 %v2929, %v2928
  %v2931 = vmul.f32 0.5, %v2930
  %v2932 = vsub.f32 1.5, %v2931
  %v2933 = vmul.f32 %v2928, %v2932
  %v2934 = vmul.f32 %v2786, %v2933
  %vm2935 = vcmp.eq.f32.partialorder %v2786, inf
  %v2936 = vsel %vm2935, %v2786, %v2934
  %vm2937 = vcmp.eq.f32.partialorder %v2786, 0.0
  %v2938 = vand.u32 %v2786, 2147483648
  %v2939 = vsel %vm2937, %v2938, %v2936
  %v2940 = vrsqrt.pop %v2806
  %v2941 = vmul.f32 %v2940, %v2806
  %v2942 = vmul.f32 %v2941, %v2940
  %v2943 = vmul.f32 0.5, %v2942
  %v2944 = vsub.f32 1.5, %v2943
  %v2945 = vmul.f32 %v2940, %v2944
  %v2946 = vmul.f32 %v2806, %v2945
  %vm2947 = vcmp.eq.f32.partialorder %v2806, inf
  %v2948 = vsel %vm2947, %v2806, %v2946
  %vm2949 = vcmp.eq.f32.partialorder %v2806, 0.0
  %v2950 = vand.u32 %v2806, 2147483648
  %v2951 = vsel %vm2949, %v2950, %v2948
  %v2952 = vrsqrt.pop %v2826
  %v2953 = vmul.f32 %v2952, %v2826
  %v2954 = vmul.f32 %v2953, %v2952
  %v2955 = vmul.f32 0.5, %v2954
  %v2956 = vsub.f32 1.5, %v2955
  %v2957 = vmul.f32 %v2952, %v2956
  %v2958 = vmul.f32 %v2826, %v2957
  %vm2959 = vcmp.eq.f32.partialorder %v2826, inf
  %v2960 = vsel %vm2959, %v2826, %v2958
  %vm2961 = vcmp.eq.f32.partialorder %v2826, 0.0
  %v2962 = vand.u32 %v2826, 2147483648
  %v2963 = vsel %vm2961, %v2962, %v2960
  %v2964 = vrsqrt.pop %v2846
  %v2965 = vmul.f32 %v2964, %v2846
  %v2966 = vmul.f32 %v2965, %v2964
  %v2967 = vmul.f32 0.5, %v2966
  %v2968 = vsub.f32 1.5, %v2967
  %v2969 = vmul.f32 %v2964, %v2968
  %v2970 = vmul.f32 %v2846, %v2969
  %vm2971 = vcmp.eq.f32.partialorder %v2846, inf
  %v2972 = vsel %vm2971, %v2846, %v2970
  %vm2973 = vcmp.eq.f32.partialorder %v2846, 0.0
  %v2974 = vand.u32 %v2846, 2147483648
  %v2975 = vsel %vm2973, %v2974, %v2972
  %v2976 = vrsqrt.pop %v2866
  %v2977 = vmul.f32 %v2976, %v2866
  %v2978 = vmul.f32 %v2977, %v2976
  %v2979 = vmul.f32 0.5, %v2978
  %v2980 = vsub.f32 1.5, %v2979
  %v2981 = vmul.f32 %v2976, %v2980
  %v2982 = vmul.f32 %v2866, %v2981
  %vm2983 = vcmp.eq.f32.partialorder %v2866, inf
  %v2984 = vsel %vm2983, %v2866, %v2982
  %vm2985 = vcmp.eq.f32.partialorder %v2866, 0.0
  %v2986 = vand.u32 %v2866, 2147483648
  %v2987 = vsel %vm2985, %v2986, %v2984
  %v2988 = vrsqrt.pop %v2886
  %v2989 = vmul.f32 %v2988, %v2886
  %v2990 = vmul.f32 %v2989, %v2988
  %v2991 = vmul.f32 0.5, %v2990
  %v2992 = vsub.f32 1.5, %v2991
  %v2993 = vmul.f32 %v2988, %v2992
  %v2994 = vmul.f32 %v2886, %v2993
  %vm2995 = vcmp.eq.f32.partialorder %v2886, inf
  %v2996 = vsel %vm2995, %v2886, %v2994
  %vm2997 = vcmp.eq.f32.partialorder %v2886, 0.0
  %v2998 = vand.u32 %v2886, 2147483648
  %v2999 = vsel %vm2997, %v2998, %v2996
  %v3000 = vrsqrt.pop %v2906
  %v3001 = vmul.f32 %v3000, %v2906
  %v3002 = vmul.f32 %v3001, %v3000
  %v3003 = vmul.f32 0.5, %v3002
  %v3004 = vsub.f32 1.5, %v3003
  %v3005 = vmul.f32 %v3000, %v3004
  %v3006 = vmul.f32 %v2906, %v3005
  %vm3007 = vcmp.eq.f32.partialorder %v2906, inf
  %v3008 = vsel %vm3007, %v2906, %v3006
  %vm3009 = vcmp.eq.f32.partialorder %v2906, 0.0
  %v3010 = vand.u32 %v2906, 2147483648
  %v3011 = vsel %vm3009, %v3010, %v3008
  %v3012 = vrsqrt.pop %v2926
  %v3013 = vmul.f32 %v3012, %v2926
  %v3014 = vmul.f32 %v3013, %v3012
  %v3015 = vmul.f32 0.5, %v3014
  %v3016 = vsub.f32 1.5, %v3015
  %v3017 = vmul.f32 %v3012, %v3016
  %v3018 = vmul.f32 %v2926, %v3017
  %vm3019 = vcmp.eq.f32.partialorder %v2926, inf
  %v3020 = vsel %vm3019, %v2926, %v3018
  %vm3021 = vcmp.eq.f32.partialorder %v2926, 0.0
  %v3022 = vand.u32 %v2926, 2147483648
  %v3023 = vsel %vm3021, %v3022, %v3020
  %v3032 = vrot.slane %v2951, 7
  %v3033 = vrot.slane %v2963, 6
  %v3034 = vrot.slane %v2975, 5
  %v3035 = vrot.slane %v2987, 4
  %v3036 = vrot.slane %v2999, 3
  %v3037 = vrot.slane %v3011, 2
  %v3038 = vrot.slane %v3023, 1
  %vm3039 = vcmask 1040384
  %v3040 = vsel %vm3039, %v2939, %v3032
  %vm3041 = vcmask 1042434
  %v3042 = vsel %vm3041, %v3033, %v3034
  %vm3043 = vcmask 1041408
  %v3044 = vsel %vm3043, %v3040, %v3042
  %vm3045 = vcmask 1044484
  %v3046 = vsel %vm3045, %v3035, %v3036
  %vm3047 = vcmask 1046534
  %v3048 = vsel %vm3047, %v3037, %v3038
  %vm3049 = vcmask 1045508
  %v3050 = vsel %vm3049, %v3046, %v3048
  %vm3051 = vcmask 1043456
  %v3052 = vsel %vm3051, %v3044, %v3050
  %3054 = vst [vmem:[%s7] sm:$0xff] %v3052
  // Predicated region
  $region30: #{rnd_forward.1} parent=0 // pred_check
    _
  $region31: #{rnd_forward.1} parent=0 // pred_check_branch
    %3056 = sbr.rel (0) target = $region33
  $region32: #{rnd_forward.1} parent=0 // pred_region
    _
  $region33: #{rnd_forward.1} parent=0 // pred_fallthru
    _
  // Predicated region
  $region34: #{rnd_forward.1} parent=0 // pred_check
    _
  $region35: #{rnd_forward.1} parent=0 // pred_check_branch
    %3058 = sbr.rel (0) target = $region37
  $region36: #{rnd_forward.1} parent=0 // pred_region
    _
  $region37: #{rnd_forward.1} parent=0 // pred_fallthru
    _

</llo_original>
